<compile_context>
chip_gen: v5e
topology: v5e:2x2
jax: 0.10.0
libtpu: 0.0.40
codegen_flags: <defaults>
</compile_context>

<pallas_src>
import numpy as np
import jax
import jax.numpy as jnp
from jax.experimental import pallas as pl
from jax.experimental.pallas import tpu as pltpu

NUM_JOINTS = 24
NUM_POSE_FEAT = 207              # 23 * 9
NUM_BETAS = 10
BLEND_K = 3 * (NUM_BETAS + NUM_POSE_FEAT)   # 651 heavy basis rows (bf16)


def _round_up(x, m):
    return ((x + m - 1) // m) * m


def _choose_tiling(V, tv_max):
    """Pick (tile, padded V, num tiles); tile is a multiple of 128, <= ~tv_max.

    The tile count is rounded up to an even number (when >1) so the single
    'parallel' grid axis splits evenly across v7x's two TensorCores.
    """
    n_tiles = max(1, -(-V // tv_max))
    if n_tiles > 1 and n_tiles % 2:
        n_tiles += 1
    tv = _round_up(-(-V // n_tiles), 128)
    return tv, tv * n_tiles, n_tiles


# ----------------------------------------------------------------------------
# Fused Pallas kernel: v_posed synthesis + linear-blend skinning, one HBM pass
# ----------------------------------------------------------------------------
def _smpl_fused_kernel(lhs_ref, tlhs_ref, sel_ref, a_ref,
                       basis_ref, tmpl_ref, w_ref, out_ref):
    # lhs_ref   : (3B, 651) bf16  block-diagonal [beta | pose_feature] coeffs
    # tlhs_ref  : (3B, 3)   f32   per-row one-hot channel selector for template
    # sel_ref   : (3, 3B, 3B) f32 channel-broadcast selectors (sel[c] @ vp)
    # a_ref     : (4, 3B, 24) f32 joint-transform rows; a[c][3b+i, j] = A[b,j,i,c]
    # basis_ref : (651, tv) bf16  [shapedirs ; posedirs]   (dominant HBM stream)
    # tmpl_ref  : (3, tv)   f32   v_template (kept f32 for accuracy)
    # w_ref     : (24, tv)  f32   skinning weights, transposed
    # out_ref   : (3B, tv)  f32   v_body rows ordered (b, i) = 3*b + i

    # v_posed: one fat bf16 matmul (f32 accumulate) + tiny f32 template matmul.
    vp = jnp.dot(lhs_ref[...], basis_ref[...],
                 preferred_element_type=jnp.float32)                    # (3B, tv)
    vp = vp + jnp.dot(tlhs_ref[...], tmpl_ref[...],
                      preferred_element_type=jnp.float32)

    # Linear-blend skinning on the still-in-VMEM tile.
    w = w_ref[...]                                                       # (24, tv)
    acc = jnp.dot(a_ref[3], w, preferred_element_type=jnp.float32)       # translations
    for c in range(3):  # static length-3 loop, independent of batch size
        t_c = jnp.dot(a_ref[c], w, preferred_element_type=jnp.float32)   # (3B, tv)
        vp_c = jnp.dot(sel_ref[c], vp, preferred_element_type=jnp.float32)  # vp[3b+c] bcast
        acc = acc + t_c * vp_c
    out_ref[...] = acc                                                   # one dense store


def smpl_fused_pallas(lhs_bd, tmpl_lhs, sel, a_rows,
                      basis_bf16, tmpl_cv, weights_T, *, tv):
    rows_v = lhs_bd.shape[0]                 # 3B
    V_pad = basis_bf16.shape[1]
    n_tiles = V_pad // tv

    flops = 2 * rows_v * V_pad * (BLEND_K + 3 + 4 * NUM_JOINTS + 3 * rows_v) \
        + 6 * rows_v * V_pad
    bytes_accessed = (BLEND_K * V_pad * 2                 # bf16 basis (dominant)
                      + (NUM_JOINTS + 3) * V_pad * 4      # weights + template
                      + rows_v * V_pad * 4                # output
                      + (lhs_bd.size * 2 + (tmpl_lhs.size + sel.size + a_rows.size) * 4))

    return pl.pallas_call(
        _smpl_fused_kernel,
        out_shape=jax.ShapeDtypeStruct((rows_v, V_pad), jnp.float32),
        grid_spec=pltpu.PrefetchScalarGridSpec(
            num_scalar_prefetch=0,
            grid=(n_tiles,),
            in_specs=[
                pl.BlockSpec(lhs_bd.shape,   lambda j: (0, 0)),      # tiny, fetched once
                pl.BlockSpec(tmpl_lhs.shape, lambda j: (0, 0)),
                pl.BlockSpec(sel.shape,      lambda j: (0, 0, 0)),
                pl.BlockSpec(a_rows.shape,   lambda j: (0, 0, 0)),
                pl.BlockSpec((BLEND_K, tv),     lambda j: (0, j)),   # streamed once total
                pl.BlockSpec((3, tv),           lambda j: (0, j)),
                pl.BlockSpec((NUM_JOINTS, tv),  lambda j: (0, j)),
            ],
            out_specs=pl.BlockSpec((rows_v, tv), lambda j: (0, j)),
        ),
        compiler_params=pltpu.CompilerParams(
            dimension_semantics=("parallel",),
            # Explicit limit is load-bearing on v5e (16 MiB default scoped VMEM).
            # tv=4096 bf16 basis block is ~5.3 MiB; even a full-V (6912) block is
            # ~9 MiB, so 48 MiB covers double-buffering on v5e/v6e/v7x.
            vmem_limit_bytes=48 * 1024 * 1024),
        cost_estimate=pl.CostEstimate(flops=int(flops), transcendentals=0,
                                      bytes_accessed=int(bytes_accessed)),
    )(lhs_bd, tmpl_lhs, sel, a_rows, basis_bf16, tmpl_cv, weights_T)


# ----------------------------------------------------------------------------
# Plain-JAX glue (Rodrigues + kinematic chain) — tiny, sequential, not hot path
# ----------------------------------------------------------------------------
def quat2mat(quat):
    norm_quat = quat / jnp.linalg.norm(quat, ord=2, axis=1, keepdims=True)
    w, x, y, z = norm_quat[:, 0], norm_quat[:, 1], norm_quat[:, 2], norm_quat[:, 3]
    B = quat.shape[0]
    w2, x2, y2, z2 = w ** 2, x ** 2, y ** 2, z ** 2
    wx, wy, wz = w * x, w * y, w * z
    xy, xz, yz = x * y, x * z, y * z
    rotMat = jnp.stack([
        w2 + x2 - y2 - z2, 2 * xy - 2 * wz, 2 * wy + 2 * xz,
        2 * wz + 2 * xy, w2 - x2 + y2 - z2, 2 * yz - 2 * wx,
        2 * xz - 2 * wy, 2 * wx + 2 * yz, w2 - x2 - y2 + z2], axis=1).reshape(B, 3, 3)
    return rotMat


def batch_rodrigues(theta):
    l1norm = jnp.linalg.norm(theta + 1e-8, ord=2, axis=1)
    angle = l1norm[:, None]
    normalized = theta / angle
    angle = angle * 0.5
    quat = jnp.concatenate([jnp.cos(angle), jnp.sin(angle) * normalized], axis=1)
    return quat2mat(quat)


def batch_global_rigid_transformation(Rs, Js, parent):
    # TODO(synk): rotate_base=True branch not exercised (default False in forward).
    N = Rs.shape[0]
    root_rotation = Rs[:, 0]
    Js = Js[..., None]                                            # (N, 24, 3, 1)

    def make_A(R, t):
        R_homo = jnp.pad(R, ((0, 0), (0, 1), (0, 0)))             # (N, 4, 3)
        t_homo = jnp.concatenate([t, jnp.ones((N, 1, 1), R.dtype)], axis=1)
        return jnp.concatenate([R_homo, t_homo], axis=2)          # (N, 4, 4)

    results = [make_A(root_rotation, Js[:, 0])]
    for i in range(1, parent.shape[0]):
        j_here = Js[:, i] - Js[:, int(parent[i])]
        A_here = make_A(Rs[:, i], j_here)
        results.append(jnp.matmul(results[int(parent[i])], A_here))
    results = jnp.stack(results, axis=1)                          # (N, 24, 4, 4)
    new_J = results[:, :, :3, 3]
    Js_w0 = jnp.concatenate(
        [Js, jnp.zeros((N, NUM_JOINTS, 1, 1), Rs.dtype)], axis=2)
    init_bone = jnp.matmul(results, Js_w0)                        # (N, 24, 4, 1)
    init_bone = jnp.pad(init_bone, ((0, 0), (0, 0), (0, 0), (3, 0)))
    A = results - init_bone
    return new_J, A


# ----------------------------------------------------------------------------
# Full forward pass (Pallas version) and pure-JAX f32 reference
# ----------------------------------------------------------------------------
def smpl_forward_pallas(theta, beta, params, *, tv=4096):
    B = theta.shape[0]
    V = int(params["num_verts"])

    Rs = batch_rodrigues(theta.reshape(-1, 3)).reshape(B, NUM_JOINTS, 3, 3)
    pose_feature = (Rs[:, 1:, :, :] - jnp.eye(3, dtype=Rs.dtype)).reshape(B, NUM_POSE_FEAT)
    beta_nb = beta[:, :NUM_BETAS]

    # --- vertex tiling (pad V to a multiple of the lane-aligned tile) --------
    tv_eff, V_pad, _ = _choose_tiling(V, tv)
    pad = V_pad - V
    basis_bf16 = params["basis_bf16"]
    tmpl_cv = params["template_cv"]
    weights_T = params["weights_T"]
    if pad:
        basis_bf16 = jnp.pad(basis_bf16, ((0, 0), (0, pad)))
        tmpl_cv = jnp.pad(tmpl_cv, ((0, 0), (0, pad)))
        weights_T = jnp.pad(weights_T, ((0, 0), (0, pad)))

    # --- block-diagonal blend coefficients, rows (b, c) = 3*b + c (bf16) ------
    eye3 = jnp.eye(3, dtype=jnp.float32)
    lhs_beta = jnp.einsum('cd,bk->bcdk', eye3, beta_nb).reshape(B * 3, 3 * NUM_BETAS)
    lhs_pose = jnp.einsum('cd,bk->bcdk', eye3, pose_feature).reshape(B * 3, 3 * NUM_POSE_FEAT)
    lhs_bd = jnp.concatenate([lhs_beta, lhs_pose], axis=1).astype(jnp.bfloat16)  # (3B, 651)
    tmpl_lhs = jnp.tile(eye3, (B, 1))                                            # (3B, 3) f32

    # --- joints via pre-folded regressors, then kinematic chain (plain JAX) ---
    J_bcj = jnp.einsum('bk,ckj->bcj', beta_nb, params["shapedirs_J"]) \
        + params["template_J"][None]
    J = jnp.transpose(J_bcj, (0, 2, 1))                                          # (B, 24, 3)
    _, A = batch_global_rigid_transformation(Rs, J, params["parents"])           # (B, 24, 4, 4)

    # Joint-transform rows for the skinning matmuls:
    #   a_rows[c][3b+i, j] = A[b, j, i, c]   (c = 3 -> translation column)
    a_rows = jnp.transpose(A[:, :, :3, :], (3, 0, 2, 1)).reshape(4, 3 * B, NUM_JOINTS)

    # Channel-broadcast selectors: (sel[c] @ vp)[3b+i] = vp[3b+c].  Tiny MXU
    # matmul instead of misaligned sublane slices / masked stores.
    sel_np = np.zeros((3, 3 * B, 3 * B), np.float32)
    for c in range(3):
        for b in range(B):
            sel_np[c, 3 * b:3 * b + 3, 3 * b + c] = 1.0
    sel = jnp.asarray(sel_np)

    # --- single fused kernel: shape+pose+template+skinning, one HBM pass ------
    v_body_2d = smpl_fused_pallas(lhs_bd, tmpl_lhs, sel, a_rows,
                                  basis_bf16, tmpl_cv, weights_T, tv=tv_eff)     # (3B, V_pad)

    v_body = v_body_2d.reshape(B, 3, V_pad)[:, :, :V]
    return jnp.transpose(v_body, (0, 2, 1))                                      # (B, V, 3)


def smpl_forward_ref(theta, beta, params):
    HI = jax.lax.Precision.HIGHEST   # true-f32 reference
    B = theta.shape[0]
    V = params["v_template"].shape[0]
    v_shaped = jnp.matmul(beta[:, :NUM_BETAS], params["shapedirs_t"],
                          precision=HI).reshape(B, V, 3) + params["v_template"]
    Jx = jnp.matmul(v_shaped[:, :, 0], params["j_regressor"], precision=HI)
    Jy = jnp.matmul(v_shaped[:, :, 1], params["j_regressor"], precision=HI)
    Jz = jnp.matmul(v_shaped[:, :, 2], params["j_regressor"], precision=HI)
    J = jnp.stack([Jx, Jy, Jz], axis=2)
    Rs = batch_rodrigues(theta.reshape(-1, 3)).reshape(B, NUM_JOINTS, 3, 3)
    pose_feature = (Rs[:, 1:, :, :] - jnp.eye(3, dtype=Rs.dtype)).reshape(B, NUM_POSE_FEAT)
    v_posed = jnp.matmul(pose_feature, params["posedirs_t"],
                         precision=HI).reshape(B, V, 3) + v_shaped
    _, A = batch_global_rigid_transformation(Rs, J, params["parents"])
    W = jnp.broadcast_to(params["weights"][None], (B, V, NUM_JOINTS))
    T = jnp.matmul(W, A.reshape(B, NUM_JOINTS, 16), precision=HI).reshape(B, V, 4, 4)
    v_posed_homo = jnp.concatenate(
        [v_posed, jnp.ones((B, V, 1), v_posed.dtype)], axis=2)
    v_homo = jnp.matmul(T, v_posed_homo[..., None], precision=HI)
    return v_homo[:, :, :3, 0]


# ----------------------------------------------------------------------------
# Deterministic synthetic SMPL parameters (replaces the .npz / .pkl loads)
# ----------------------------------------------------------------------------
def make_smpl_params(key, V):
    ks = jax.random.split(key, 5)
    v_template = jax.random.normal(ks[0], (V, 3), jnp.float32)
    shapedirs_v3k = 0.03 * jax.random.normal(ks[1], (V, 3, NUM_BETAS), jnp.float32)
    posedirs_v3p = 0.01 * jax.random.normal(ks[2], (V, 3, NUM_POSE_FEAT), jnp.float32)
    j_regressor = jax.nn.softmax(
        jax.random.normal(ks[3], (V, NUM_JOINTS), jnp.float32), axis=0)    # (V, 24)
    weights = jax.nn.softmax(
        jax.random.normal(ks[4], (V, NUM_JOINTS), jnp.float32), axis=1)    # (V, 24)
    parents = np.array([0, 0, 0, 0, 1, 2, 3, 4, 5, 6, 7, 8, 9, 9, 9,
                        12, 13, 14, 16, 17, 18, 19, 20, 21], dtype=np.int32)

    # kernel layouts (vertices on the lane axis)
    shapedirs_cnv = jnp.transpose(shapedirs_v3k, (1, 2, 0))                # (3, NB, V)
    posedirs_cnv = jnp.transpose(posedirs_v3p, (1, 2, 0))                  # (3, 207, V)
    v_template_cv = v_template.T                                           # (3, V)

    # Heavy basis rows stored bf16 (small 0.01-0.03-scale correctives); the
    # O(1)-magnitude v_template stays f32 and is added separately in-kernel.
    basis_bf16 = jnp.concatenate([
        shapedirs_cnv.reshape(3 * NUM_BETAS, V),
        posedirs_cnv.reshape(3 * NUM_POSE_FEAT, V)], axis=0).astype(jnp.bfloat16)  # (651, V)

    # joint regressor folded into tiny constants (J = beta @ shapedirs_J + template_J)
    shapedirs_J = jnp.einsum('ckv,vj->ckj', shapedirs_cnv, j_regressor)    # (3, NB, 24)
    template_J = v_template_cv @ j_regressor                               # (3, 24)

    return dict(
        num_verts=V,
        # PyTorch-buffer layouts (used by the pure-JAX reference)
        v_template=v_template,                                             # (V, 3)
        shapedirs_t=shapedirs_v3k.reshape(V * 3, NUM_BETAS).T,             # (NB, 3V)
        posedirs_t=posedirs_v3p.reshape(V * 3, NUM_POSE_FEAT).T,           # (207, 3V)
        j_regressor=j_regressor,                                           # (V, 24)
        weights=weights,                                                   # (V, 24)
        parents=parents,
        # kernel layouts
        basis_bf16=basis_bf16,                                             # (651, V) bf16
        template_cv=v_template_cv,                                         # (3, V)   f32
        weights_T=weights.T,                                               # (24, V)  f32
        shapedirs_J=shapedirs_J,
        template_J=template_J,
    )


if __name__ == "__main__":
    B = 2
    V = 520   # small synthetic vertex count, deliberately NOT a multiple of 128
              # to exercise the lane-padding path (real SMPL: 6890)

    key = jax.random.PRNGKey(0)
    kt, kb, kp = jax.random.split(key, 3)
    theta = 0.3 * jax.random.normal(kt, (B, NUM_JOINTS * 3), jnp.float32)
    beta = jax.random.normal(kb, (B, NUM_BETAS), jnp.float32)
    params = make_smpl_params(kp, V)

    # Small tile here so the test exercises the multi-tile grid (even tile count)
    # and the padded tail; production default is tv=4096 (two tiles for real SMPL,
    # even split across v7x's 2 TensorCores; pass tv>=V for a single full-V tile
    # on v5e/v6e).
    fwd = jax.jit(lambda th, be: smpl_forward_pallas(th, be, params, tv=256))
    v_body = jax.block_until_ready(fwd(theta, beta))

    v_ref = jax.block_until_ready(smpl_forward_ref(theta, beta, params))

    assert v_body.shape == (B, V, 3)
    # Tolerance covers the bf16 storage of the shapedirs/posedirs correctives
    # (f32 accumulation, f32 template) plus the f32 re-association of the folded
    # joint regressor; the reference runs at HIGHEST (true f32) precision.
    np.testing.assert_allclose(np.asarray(v_body), np.asarray(v_ref),
                               rtol=2e-3, atol=2e-3)
    print("KERNEL_OK")
</pallas_src>

<mosaic_0001>
module attributes {stable_mosaic.version = 11 : i64} {
  func.func @_smpl_fused_kernel(%arg0: i32, %arg1: memref<6x651xbf16, #tpu.memory_space<vmem>>, %arg2: memref<6x3xf32, #tpu.memory_space<vmem>>, %arg3: memref<3x6x6xf32, #tpu.memory_space<vmem>>, %arg4: memref<4x6x24xf32, #tpu.memory_space<vmem>>, %arg5: memref<651x256xbf16, #tpu.memory_space<vmem>>, %arg6: memref<3x256xf32, #tpu.memory_space<vmem>>, %arg7: memref<24x256xf32, #tpu.memory_space<vmem>>, %arg8: memref<6x256xf32, #tpu.memory_space<vmem>>) attributes {dimension_semantics = [#tpu.dimension_semantics<parallel>], iteration_bounds = array<i64: 4>, scalar_prefetch = 0 : i64, scratch_operands = 0 : i64, tpu.core_type = #tpu.core_type<tc>, window_params = [{pipeline_mode = #tpu.pipeline_mode<synchronous>, transform_indices = @transform_0, window_bounds = array<i64: 6, 651>}, {pipeline_mode = #tpu.pipeline_mode<synchronous>, transform_indices = @transform_1, window_bounds = array<i64: 6, 3>}, {pipeline_mode = #tpu.pipeline_mode<synchronous>, transform_indices = @transform_2, window_bounds = array<i64: 3, 6, 6>}, {pipeline_mode = #tpu.pipeline_mode<synchronous>, transform_indices = @transform_3, window_bounds = array<i64: 4, 6, 24>}, {transform_indices = @transform_4, window_bounds = array<i64: 651, 256>}, {transform_indices = @transform_5, window_bounds = array<i64: 3, 256>}, {transform_indices = @transform_6, window_bounds = array<i64: 24, 256>}, {transform_indices = @transform_7, window_bounds = array<i64: 6, 256>}]} {
    %c0 = arith.constant 0 : index
    %c0_0 = arith.constant 0 : index
    %0 = vector.load %arg1[%c0, %c0_0] : memref<6x651xbf16, #tpu.memory_space<vmem>>, vector<6x651xbf16>
    %c0_1 = arith.constant 0 : index
    %c0_2 = arith.constant 0 : index
    %1 = vector.load %arg5[%c0_1, %c0_2] : memref<651x256xbf16, #tpu.memory_space<vmem>>, vector<651x256xbf16>
    %cst = arith.constant dense<0.000000e+00> : vector<6x256xf32>
    %2 = tpu.matmul %0, %1, %cst {dimension_numbers = #tpu.dot_dimension_numbers<[1], [0], [0], [1], [0, 0, 1, 1], [], []>} : vector<6x651xbf16>, vector<651x256xbf16>, vector<6x256xf32> -> vector<6x256xf32>
    %c0_3 = arith.constant 0 : index
    %c0_4 = arith.constant 0 : index
    %3 = vector.load %arg2[%c0_3, %c0_4] : memref<6x3xf32, #tpu.memory_space<vmem>>, vector<6x3xf32>
    %c0_5 = arith.constant 0 : index
    %c0_6 = arith.constant 0 : index
    %4 = vector.load %arg6[%c0_5, %c0_6] : memref<3x256xf32, #tpu.memory_space<vmem>>, vector<3x256xf32>
    %cst_7 = arith.constant dense<0.000000e+00> : vector<6x256xf32>
    %5 = tpu.matmul %3, %4, %cst_7 {dimension_numbers = #tpu.dot_dimension_numbers<[1], [0], [0], [1], [0, 0, 1, 1], [], []>} : vector<6x3xf32>, vector<3x256xf32>, vector<6x256xf32> -> vector<6x256xf32>
    %6 = arith.addf %2, %5 : vector<6x256xf32>
    %c0_8 = arith.constant 0 : index
    %c0_9 = arith.constant 0 : index
    %7 = vector.load %arg7[%c0_8, %c0_9] : memref<24x256xf32, #tpu.memory_space<vmem>>, vector<24x256xf32>
    %c3 = arith.constant 3 : index
    %c0_10 = arith.constant 0 : index
    %c0_11 = arith.constant 0 : index
    %8 = vector.load %arg4[%c3, %c0_10, %c0_11] : memref<4x6x24xf32, #tpu.memory_space<vmem>>, vector<1x6x24xf32>
    %9 = vector.shape_cast %8 : vector<1x6x24xf32> to vector<6x24xf32>
    %cst_12 = arith.constant dense<0.000000e+00> : vector<6x256xf32>
    %10 = tpu.matmul %9, %7, %cst_12 {dimension_numbers = #tpu.dot_dimension_numbers<[1], [0], [0], [1], [0, 0, 1, 1], [], []>} : vector<6x24xf32>, vector<24x256xf32>, vector<6x256xf32> -> vector<6x256xf32>
    %c0_13 = arith.constant 0 : index
    %c0_14 = arith.constant 0 : index
    %c0_15 = arith.constant 0 : index
    %11 = vector.load %arg4[%c0_13, %c0_14, %c0_15] : memref<4x6x24xf32, #tpu.memory_space<vmem>>, vector<1x6x24xf32>
    %12 = vector.shape_cast %11 : vector<1x6x24xf32> to vector<6x24xf32>
    %cst_16 = arith.constant dense<0.000000e+00> : vector<6x256xf32>
    %13 = tpu.matmul %12, %7, %cst_16 {dimension_numbers = #tpu.dot_dimension_numbers<[1], [0], [0], [1], [0, 0, 1, 1], [], []>} : vector<6x24xf32>, vector<24x256xf32>, vector<6x256xf32> -> vector<6x256xf32>
    %c0_17 = arith.constant 0 : index
    %c0_18 = arith.constant 0 : index
    %c0_19 = arith.constant 0 : index
    %14 = vector.load %arg3[%c0_17, %c0_18, %c0_19] : memref<3x6x6xf32, #tpu.memory_space<vmem>>, vector<1x6x6xf32>
    %15 = vector.shape_cast %14 : vector<1x6x6xf32> to vector<6x6xf32>
    %cst_20 = arith.constant dense<0.000000e+00> : vector<6x256xf32>
    %16 = tpu.matmul %15, %6, %cst_20 {dimension_numbers = #tpu.dot_dimension_numbers<[1], [0], [0], [1], [0, 0, 1, 1], [], []>} : vector<6x6xf32>, vector<6x256xf32>, vector<6x256xf32> -> vector<6x256xf32>
    %17 = arith.mulf %13, %16 : vector<6x256xf32>
    %18 = arith.addf %10, %17 : vector<6x256xf32>
    %c1 = arith.constant 1 : index
    %c0_21 = arith.constant 0 : index
    %c0_22 = arith.constant 0 : index
    %19 = vector.load %arg4[%c1, %c0_21, %c0_22] : memref<4x6x24xf32, #tpu.memory_space<vmem>>, vector<1x6x24xf32>
    %20 = vector.shape_cast %19 : vector<1x6x24xf32> to vector<6x24xf32>
    %cst_23 = arith.constant dense<0.000000e+00> : vector<6x256xf32>
    %21 = tpu.matmul %20, %7, %cst_23 {dimension_numbers = #tpu.dot_dimension_numbers<[1], [0], [0], [1], [0, 0, 1, 1], [], []>} : vector<6x24xf32>, vector<24x256xf32>, vector<6x256xf32> -> vector<6x256xf32>
    %c1_24 = arith.constant 1 : index
    %c0_25 = arith.constant 0 : index
    %c0_26 = arith.constant 0 : index
    %22 = vector.load %arg3[%c1_24, %c0_25, %c0_26] : memref<3x6x6xf32, #tpu.memory_space<vmem>>, vector<1x6x6xf32>
    %23 = vector.shape_cast %22 : vector<1x6x6xf32> to vector<6x6xf32>
    %cst_27 = arith.constant dense<0.000000e+00> : vector<6x256xf32>
    %24 = tpu.matmul %23, %6, %cst_27 {dimension_numbers = #tpu.dot_dimension_numbers<[1], [0], [0], [1], [0, 0, 1, 1], [], []>} : vector<6x6xf32>, vector<6x256xf32>, vector<6x256xf32> -> vector<6x256xf32>
    %25 = arith.mulf %21, %24 : vector<6x256xf32>
    %26 = arith.addf %18, %25 : vector<6x256xf32>
    %c2 = arith.constant 2 : index
    %c0_28 = arith.constant 0 : index
    %c0_29 = arith.constant 0 : index
    %27 = vector.load %arg4[%c2, %c0_28, %c0_29] : memref<4x6x24xf32, #tpu.memory_space<vmem>>, vector<1x6x24xf32>
    %28 = vector.shape_cast %27 : vector<1x6x24xf32> to vector<6x24xf32>
    %cst_30 = arith.constant dense<0.000000e+00> : vector<6x256xf32>
    %29 = tpu.matmul %28, %7, %cst_30 {dimension_numbers = #tpu.dot_dimension_numbers<[1], [0], [0], [1], [0, 0, 1, 1], [], []>} : vector<6x24xf32>, vector<24x256xf32>, vector<6x256xf32> -> vector<6x256xf32>
    %c2_31 = arith.constant 2 : index
    %c0_32 = arith.constant 0 : index
    %c0_33 = arith.constant 0 : index
    %30 = vector.load %arg3[%c2_31, %c0_32, %c0_33] : memref<3x6x6xf32, #tpu.memory_space<vmem>>, vector<1x6x6xf32>
    %31 = vector.shape_cast %30 : vector<1x6x6xf32> to vector<6x6xf32>
    %cst_34 = arith.constant dense<0.000000e+00> : vector<6x256xf32>
    %32 = tpu.matmul %31, %6, %cst_34 {dimension_numbers = #tpu.dot_dimension_numbers<[1], [0], [0], [1], [0, 0, 1, 1], [], []>} : vector<6x6xf32>, vector<6x256xf32>, vector<6x256xf32> -> vector<6x256xf32>
    %33 = arith.mulf %29, %32 : vector<6x256xf32>
    %34 = arith.addf %26, %33 : vector<6x256xf32>
    %c0_35 = arith.constant 0 : index
    %c0_36 = arith.constant 0 : index
    %35 = vector.load %arg8[%c0_35, %c0_36] : memref<6x256xf32, #tpu.memory_space<vmem>>, vector<6x256xf32>
    tpu.vector_store %arg8[%c0_35, %c0_36], %34 {strides = array<i32>} : memref<6x256xf32, #tpu.memory_space<vmem>>, vector<6x256xf32>,
    return
  }
  func.func @transform_0(%arg0: i32) -> (i32, i32) {
    %c0_i32 = arith.constant 0 : i32
    %c0_i32_0 = arith.constant 0 : i32
    %c0_i32_1 = arith.constant 0 : i32
    return %c0_i32, %c0_i32_0 : i32, i32
  }
  func.func @transform_1(%arg0: i32) -> (i32, i32) {
    %c0_i32 = arith.constant 0 : i32
    %c0_i32_0 = arith.constant 0 : i32
    %c0_i32_1 = arith.constant 0 : i32
    return %c0_i32, %c0_i32_0 : i32, i32
  }
  func.func @transform_2(%arg0: i32) -> (i32, i32, i32) {
    %c0_i32 = arith.constant 0 : i32
    %c0_i32_0 = arith.constant 0 : i32
    %c0_i32_1 = arith.constant 0 : i32
    %c0_i32_2 = arith.constant 0 : i32
    return %c0_i32, %c0_i32_0, %c0_i32_1 : i32, i32, i32
  }
  func.func @transform_3(%arg0: i32) -> (i32, i32, i32) {
    %c0_i32 = arith.constant 0 : i32
    %c0_i32_0 = arith.constant 0 : i32
    %c0_i32_1 = arith.constant 0 : i32
    %c0_i32_2 = arith.constant 0 : i32
    return %c0_i32, %c0_i32_0, %c0_i32_1 : i32, i32, i32
  }
  func.func @transform_4(%arg0: i32) -> (i32, i32) {
    %c0_i32 = arith.constant 0 : i32
    %c0_i32_0 = arith.constant 0 : i32
    return %c0_i32, %arg0 : i32, i32
  }
  func.func @transform_5(%arg0: i32) -> (i32, i32) {
    %c0_i32 = arith.constant 0 : i32
    %c0_i32_0 = arith.constant 0 : i32
    return %c0_i32, %arg0 : i32, i32
  }
  func.func @transform_6(%arg0: i32) -> (i32, i32) {
    %c0_i32 = arith.constant 0 : i32
    %c0_i32_0 = arith.constant 0 : i32
    return %c0_i32, %arg0 : i32, i32
  }
  func.func @transform_7(%arg0: i32) -> (i32, i32) {
    %c0_i32 = arith.constant 0 : i32
    %c0_i32_0 = arith.constant 0 : i32
    return %c0_i32, %arg0 : i32, i32
  }
}

</mosaic_0001>

<llo_original>
// kernel: tile.9
$region0: #{tile.9}
  %s0 = inlined_call_operand.vmem [shape: f32[2,3,3], index: 0, kind: input, shape index: {}]
  %s1 = inlined_call_operand.vmem [shape: f32[6,3], index: 1, kind: output, shape index: {}]
  $region1: #{tile.9} parent=0
    #allocation0 [shape = 'u8[4096]{0}', space=vmem, size = 0x1000, scoped, tag = 'scoped mem for output reshape']
    #allocation1 [shape = 'u8[12288]{0}', space=vmem, size = 0x3000, scoped, tag = 'scoped mem for input reshape']
    %s3 = ssub.s32 4, 1
    %s4 = scalar_lea.vmem %s0, 4
    %v5 = vld [vmem:[%s4] sm:%s3]
    %s6 = scalar_lea.vmem [#allocation1], 16
    %7 = vst [vmem:[%s6] sm:%s3] %v5
    %s8 = scalar_lea.vmem %s0, 2
    %v9 = vld [vmem:[%s8] sm:%s3]
    %s10 = scalar_lea.vmem [#allocation1], 8
    %11 = vst [vmem:[%s10] sm:%s3] %v9
    %v12 = vld [vmem:[%s0] sm:%s3]
    %13 = vst [vmem:[#allocation1] sm:%s3] %v12
    %v14 = vld [vmem:[#allocation1] ss:$8 sm:$0x7]
    %vm15 = vcmask 23552
    %16 = vst.msk [vmem:[#allocation0] sm:$0x7] %vm15, %v14
    %s17 = scalar_lea.vmem [#allocation1], 1
    %v18 = vld [vmem:[%s17] ss:$8 sm:$0x7]
    %19 = vrot.lane.b32.xlu0 %v18, 3
    %v20 = vpop.permute.xlu0 %19
    %vm21 = vcmask 48152
    %22 = vst.msk [vmem:[#allocation0] sm:$0x7] %vm21, %v20
    %s24 = ssub.s32 16, 1
    %v25 = vld [vmem:[#allocation0] sm:%s24]
    %s27 = ssub.s32 16, 1
    %28 = vst [vmem:[%s1] sm:%s27] %v25

// kernel: _lambda_.1
$region0: #{_lambda_.1}
  #allocation0 [shape = 'u32[]', space=smem, size = 0x4, offset = 0x4, fixed_abs, tag = 'smem constant byte address 0x4 - core index']
  #allocation1 [shape = 'u32[72,128]{1,0:T(1,128)}', space=vmem, size = 0x9000, scoped, tag = 'internal scratch']
  %s0 = inlined_call_operand.vmem [shape: bf16[6,651], index: 0, kind: input, shape index: {}]
  %s1 = inlined_call_operand.vmem [shape: f32[6,3], index: 1, kind: input, shape index: {}]
  %s2 = inlined_call_operand.vmem [shape: f32[3,6,6], index: 2, kind: input, shape index: {}]
  %s3 = inlined_call_operand.vmem [shape: f32[4,6,24], index: 3, kind: input, shape index: {}]
  %s4 = inlined_call_operand.vmem [shape: bf16[651,1024], index: 4, kind: input, shape index: {}]
  %s5 = inlined_call_operand.vmem [shape: f32[3,1024], index: 5, kind: input, shape index: {}]
  %s6 = inlined_call_operand.vmem [shape: f32[24,1024], index: 6, kind: input, shape index: {}]
  %s7 = inlined_call_operand.vmem [shape: f32[6,1024], index: 7, kind: output, shape index: {}]
  %s8 = sld [smem:[#allocation0]]
  $region122: #{_lambda_.1} parent=0
    _
  %s10 = ssub.s32 1, %s8
  %s11 = scalar_select 0, %s10, %s8
  $region1: #{_lambda_.1} parent=0
    #allocation2 [shape = 'u8[671744]{0}', space=vmem, size = 0xa4000, scoped, tag = 'input window, operand 4']
    #allocation3 [shape = 'u8[49152]{0}', space=vmem, size = 0xc000, scoped, tag = 'input window, operand 6']
    loop: start=0, step=1, limit=6
    $region2: #{_lambda_.1} parent=1 // loop_pre_header
      _
    $region3: #{_lambda_.1} parent=1 // loop_header
      %s13 = sphi 0, %s17
      %p14 = scmp.ge.s32.totalorder %s13, 6
      %s21 = sphi 0, %s21
      %s23 = sphi 0, %s21
      %s24 = sphi 0, %s23
      %s38 = sphi 0, %s24
      %s42 = sphi 0, %s42
      %s44 = sphi 0, %s42
      %s45 = sphi 0, %s44
      %s59 = sphi 0, %s45
      %s63 = sphi 0, %s63
      %s65 = sphi 0, %s63
      %s66 = sphi 0, %s65
      %s80 = sphi 0, %s66
      %s84 = sphi 0, %s84
      %s86 = sphi 0, %s84
      %s87 = sphi 0, %s86
      %s101 = sphi 0, %s87
      %s107 = sphi 0, %s109
      %s110 = sphi 0, %s107
      %s111 = sphi 0, %s110
      %s127 = sphi 0, %s111
      %s133 = sphi 0, %s135
      %s136 = sphi 0, %s133
      %s137 = sphi 0, %s136
      %s153 = sphi 0, %s137
      %s159 = sphi 0, %s161
      %s162 = sphi 0, %s159
      %s163 = sphi 0, %s162
      %s179 = sphi 0, %s163
      %s185 = sphi 0, %s187
      %s188 = sphi 0, %s185
      %s189 = sphi 0, %s188
      %s205 = sphi 0, %s189
    $region4: #{_lambda_.1} parent=1 // loop_header_branch
      %16 = sbr.rel (%p14) target = $region8
    $region5: #{_lambda_.1} parent=1 // loop_body
      %s18 = ssub.s32 %s13, 1
      %s19 = ssub.s32 %s13, 2
      %s20 = sadd.s32 %s13, 1
      %s22 = sadd.s32 %s21, 1
      %p25 = scmp.eq.s32.totalorder %s13, 3
      %p26 = scmp.ne.s32.totalorder %s21, %s23
      %p27 = scmp.eq.s32.totalorder %s13, 0
      %p28 = por %p26, %p27
      %p29 = scmp.ne.s32.totalorder %s21, %s23
      %p30 = scmp.eq.s32.totalorder %s18, 3
      %p31 = por %p29, %p30
      %p32 = scmp.ne.s32.totalorder %s23, %s24
      %p33 = scmp.eq.s32.totalorder %s18, 0
      %p34 = por %p32, %p33
      %p35 = scmp.ne.s32.totalorder %s23, %s24
      %p36 = scmp.eq.s32.totalorder %s19, 3
      %p37 = por %p35, %p36
      %p39 = scmp.ne.s32.totalorder %s24, %s38
      %p40 = scmp.eq.s32.totalorder %s19, 0
      %p41 = por %p39, %p40
      %s43 = sadd.s32 %s42, 1
      %p46 = scmp.eq.s32.totalorder %s13, 3
      %p47 = scmp.ne.s32.totalorder %s42, %s44
      %p48 = scmp.eq.s32.totalorder %s13, 0
      %p49 = por %p47, %p48
      %p50 = scmp.ne.s32.totalorder %s42, %s44
      %p51 = scmp.eq.s32.totalorder %s18, 3
      %p52 = por %p50, %p51
      %p53 = scmp.ne.s32.totalorder %s44, %s45
      %p54 = scmp.eq.s32.totalorder %s18, 0
      %p55 = por %p53, %p54
      %p56 = scmp.ne.s32.totalorder %s44, %s45
      %p57 = scmp.eq.s32.totalorder %s19, 3
      %p58 = por %p56, %p57
      %p60 = scmp.ne.s32.totalorder %s45, %s59
      %p61 = scmp.eq.s32.totalorder %s19, 0
      %p62 = por %p60, %p61
      %s64 = sadd.s32 %s63, 1
      %p67 = scmp.eq.s32.totalorder %s13, 3
      %p68 = scmp.ne.s32.totalorder %s63, %s65
      %p69 = scmp.eq.s32.totalorder %s13, 0
      %p70 = por %p68, %p69
      %p71 = scmp.ne.s32.totalorder %s63, %s65
      %p72 = scmp.eq.s32.totalorder %s18, 3
      %p73 = por %p71, %p72
      %p74 = scmp.ne.s32.totalorder %s65, %s66
      %p75 = scmp.eq.s32.totalorder %s18, 0
      %p76 = por %p74, %p75
      %p77 = scmp.ne.s32.totalorder %s65, %s66
      %p78 = scmp.eq.s32.totalorder %s19, 3
      %p79 = por %p77, %p78
      %p81 = scmp.ne.s32.totalorder %s66, %s80
      %p82 = scmp.eq.s32.totalorder %s19, 0
      %p83 = por %p81, %p82
      %s85 = sadd.s32 %s84, 1
      %p88 = scmp.eq.s32.totalorder %s13, 3
      %p89 = scmp.ne.s32.totalorder %s84, %s86
      %p90 = scmp.eq.s32.totalorder %s13, 0
      %p91 = por %p89, %p90
      %p92 = scmp.ne.s32.totalorder %s84, %s86
      %p93 = scmp.eq.s32.totalorder %s18, 3
      %p94 = por %p92, %p93
      %p95 = scmp.ne.s32.totalorder %s86, %s87
      %p96 = scmp.eq.s32.totalorder %s18, 0
      %p97 = por %p95, %p96
      %p98 = scmp.ne.s32.totalorder %s86, %s87
      %p99 = scmp.eq.s32.totalorder %s19, 3
      %p100 = por %p98, %p99
      %p102 = scmp.ne.s32.totalorder %s87, %s101
      %p103 = scmp.eq.s32.totalorder %s19, 0
      %p104 = por %p102, %p103
      %s105 = ssub.s32 %s13, %s20
      %p106 = scmp.eq.s32.totalorder %s105, 0
      %s108 = sadd.s32 %s107, 1
      %s109 = scalar_select %p106, %s107, %s108
      %p112 = pneg %p106
      %p113 = scmp.eq.s32.totalorder %s13, 3
      %p114 = por %p112, %p113
      %p115 = scmp.ne.s32.totalorder %s107, %s110
      %p116 = scmp.eq.s32.totalorder %s13, 0
      %p117 = por %p115, %p116
      %p118 = scmp.ne.s32.totalorder %s107, %s110
      %p119 = scmp.eq.s32.totalorder %s18, 3
      %p120 = por %p118, %p119
      %p121 = scmp.ne.s32.totalorder %s110, %s111
      %p122 = scmp.eq.s32.totalorder %s18, 0
      %p123 = por %p121, %p122
      %p124 = scmp.ne.s32.totalorder %s110, %s111
      %p125 = scmp.eq.s32.totalorder %s19, 3
      %p126 = por %p124, %p125
      %p128 = scmp.ne.s32.totalorder %s111, %s127
      %p129 = scmp.eq.s32.totalorder %s19, 0
      %p130 = por %p128, %p129
      %s131 = ssub.s32 %s13, %s20
      %p132 = scmp.eq.s32.totalorder %s131, 0
      %s134 = sadd.s32 %s133, 1
      %s135 = scalar_select %p132, %s133, %s134
      %p138 = pneg %p132
      %p139 = scmp.eq.s32.totalorder %s13, 3
      %p140 = por %p138, %p139
      %p141 = scmp.ne.s32.totalorder %s133, %s136
      %p142 = scmp.eq.s32.totalorder %s13, 0
      %p143 = por %p141, %p142
      %p144 = scmp.ne.s32.totalorder %s133, %s136
      %p145 = scmp.eq.s32.totalorder %s18, 3
      %p146 = por %p144, %p145
      %p147 = scmp.ne.s32.totalorder %s136, %s137
      %p148 = scmp.eq.s32.totalorder %s18, 0
      %p149 = por %p147, %p148
      %p150 = scmp.ne.s32.totalorder %s136, %s137
      %p151 = scmp.eq.s32.totalorder %s19, 3
      %p152 = por %p150, %p151
      %p154 = scmp.ne.s32.totalorder %s137, %s153
      %p155 = scmp.eq.s32.totalorder %s19, 0
      %p156 = por %p154, %p155
      %s157 = ssub.s32 %s13, %s20
      %p158 = scmp.eq.s32.totalorder %s157, 0
      %s160 = sadd.s32 %s159, 1
      %s161 = scalar_select %p158, %s159, %s160
      %p164 = pneg %p158
      %p165 = scmp.eq.s32.totalorder %s13, 3
      %p166 = por %p164, %p165
      %p167 = scmp.ne.s32.totalorder %s159, %s162
      %p168 = scmp.eq.s32.totalorder %s13, 0
      %p169 = por %p167, %p168
      %p170 = scmp.ne.s32.totalorder %s159, %s162
      %p171 = scmp.eq.s32.totalorder %s18, 3
      %p172 = por %p170, %p171
      %p173 = scmp.ne.s32.totalorder %s162, %s163
      %p174 = scmp.eq.s32.totalorder %s18, 0
      %p175 = por %p173, %p174
      %p176 = scmp.ne.s32.totalorder %s162, %s163
      %p177 = scmp.eq.s32.totalorder %s19, 3
      %p178 = por %p176, %p177
      %p180 = scmp.ne.s32.totalorder %s163, %s179
      %p181 = scmp.eq.s32.totalorder %s19, 0
      %p182 = por %p180, %p181
      %s183 = ssub.s32 %s13, %s20
      %p184 = scmp.eq.s32.totalorder %s183, 0
      %s186 = sadd.s32 %s185, 1
      %s187 = scalar_select %p184, %s185, %s186
      %p190 = pneg %p184
      %p191 = scmp.eq.s32.totalorder %s13, 3
      %p192 = por %p190, %p191
      %p193 = scmp.ne.s32.totalorder %s185, %s188
      %p194 = scmp.eq.s32.totalorder %s13, 0
      %p195 = por %p193, %p194
      %p196 = scmp.ne.s32.totalorder %s185, %s188
      %p197 = scmp.eq.s32.totalorder %s18, 3
      %p198 = por %p196, %p197
      %p199 = scmp.ne.s32.totalorder %s188, %s189
      %p200 = scmp.eq.s32.totalorder %s18, 0
      %p201 = por %p199, %p200
      %p202 = scmp.ne.s32.totalorder %s188, %s189
      %p203 = scmp.eq.s32.totalorder %s19, 3
      %p204 = por %p202, %p203
      %p206 = scmp.ne.s32.totalorder %s189, %s205
      %p207 = scmp.eq.s32.totalorder %s19, 0
      %p208 = por %p206, %p207
      %p209 = scmp.le.s32.totalorder 1, %s13
      %p210 = scmp.lt.s32.totalorder %s13, 5
      %p211 = pnand %p209, %p210
      %p212 = pneg %p211
      // Predicated region
      $region9: #{_lambda_.1} parent=5 // pred_check
        _
      $region10: #{_lambda_.1} parent=5 // pred_check_branch
        %214 = sbr.rel (%p211) target = $region12
      $region11: #{_lambda_.1} parent=5 // pred_region
        %s215 = ssub.s32 %s13, 1
        // Predicated region
        $region13: #{_lambda_.1} parent=11 // pred_check
          %p216 = pneg %p34
        $region14: #{_lambda_.1} parent=11 // pred_check_branch
          %218 = sbr.rel (%p216) target = $region16
        $region15: #{_lambda_.1} parent=11 // pred_region
          _
        $region16: #{_lambda_.1} parent=11 // pred_fallthru
          _
        // Predicated region
        $region17: #{_lambda_.1} parent=11 // pred_check
          %p219 = pneg %p55
        $region18: #{_lambda_.1} parent=11 // pred_check_branch
          %221 = sbr.rel (%p219) target = $region20
        $region19: #{_lambda_.1} parent=11 // pred_region
          _
        $region20: #{_lambda_.1} parent=11 // pred_fallthru
          _
        // Predicated region
        $region21: #{_lambda_.1} parent=11 // pred_check
          %p222 = pneg %p76
        $region22: #{_lambda_.1} parent=11 // pred_check_branch
          %224 = sbr.rel (%p222) target = $region24
        $region23: #{_lambda_.1} parent=11 // pred_region
          _
        $region24: #{_lambda_.1} parent=11 // pred_fallthru
          _
        // Predicated region
        $region25: #{_lambda_.1} parent=11 // pred_check
          %p225 = pneg %p97
        $region26: #{_lambda_.1} parent=11 // pred_check_branch
          %227 = sbr.rel (%p225) target = $region28
        $region27: #{_lambda_.1} parent=11 // pred_region
          _
        $region28: #{_lambda_.1} parent=11 // pred_fallthru
          _
      $region12: #{_lambda_.1} parent=5 // pred_fallthru
        _
      %p228 = scmp.lt.s32.totalorder %s13, 4
      // Predicated region
      $region29: #{_lambda_.1} parent=5 // pred_check
        %p229 = pneg %p228
      $region30: #{_lambda_.1} parent=5 // pred_check_branch
        %231 = sbr.rel (%p229) target = $region32
      $region31: #{_lambda_.1} parent=5 // pred_region
        // Predicated region
        $region33: #{_lambda_.1} parent=31 // pred_check
          %p232 = pneg %p117
        $region34: #{_lambda_.1} parent=31 // pred_check_branch
          %234 = sbr.rel (%p232) target = $region36
        $region35: #{_lambda_.1} parent=31 // pred_region
          %s235 = sand.u32 %s107, 1
          %s236 = sand.u32 %s107, 1
          %s237 = smul.addr %s236, 656
          %s238 = scalar_lea.vmem [#allocation2], %s237
          %s239 = smul.u32 2, %s13
          %s240 = smul.addr %s239, 4
          %s241 = scalar_lea.vmem %s4, %s240
          // Predicated region
          $region37: #{_lambda_.1} parent=35 // pred_check
            _
          $region38: #{_lambda_.1} parent=35 // pred_check_branch
            %243 = sbr.rel (0) target = $region40
          $region39: #{_lambda_.1} parent=35 // pred_region
            // Predicated region
            $region41: #{_lambda_.1} parent=39 // pred_check
              _
            $region42: #{_lambda_.1} parent=39 // pred_check_branch
              %245 = sbr.rel (0) target = $region44
            $region43: #{_lambda_.1} parent=39 // pred_region
              // Predicated region
              $region56: #{_lambda_.1} parent=43 // pred_check
                _
              $region57: #{_lambda_.1} parent=43 // pred_check_branch
                %423 = sbr.rel (0) target = $region59
              $region58: #{_lambda_.1} parent=43 // pred_region
                loop: start=0, step=1, limit=1
                $region60: #{_lambda_.1} parent=58 // loop_pre_header
                  _
                $region61: #{_lambda_.1} parent=58 // loop_header
                  %s425 = sphi 0, %s429
                  %p426 = scmp.ge.s32.totalorder %s425, 1
                  %s430 = sphi %s241, %s241
                  %s431 = sphi %s238, %s238
                $region62: #{_lambda_.1} parent=58 // loop_header_branch
                  %428 = sbr.rel (%p426) target = $region66
                $region63: #{_lambda_.1} parent=58 // loop_body
                  %v432 = vld [vmem:[%s430] sm:$0xff]
                  %433 = vst [vmem:[%s431] sm:$0xff] %v432
                  %v434 = vld [vmem:[%s430 + $0x20] sm:$0xff]
                  %435 = vst [vmem:[%s431 + $0x8] sm:$0xff] %v434
                  %v436 = vld [vmem:[%s430 + $0x40] sm:$0xff]
                  %437 = vst [vmem:[%s431 + $0x10] sm:$0xff] %v436
                  %v438 = vld [vmem:[%s430 + $0x60] sm:$0xff]
                  %439 = vst [vmem:[%s431 + $0x18] sm:$0xff] %v438
                  %v440 = vld [vmem:[%s430 + $0x80] sm:$0xff]
                  %441 = vst [vmem:[%s431 + $0x20] sm:$0xff] %v440
                  %v442 = vld [vmem:[%s430 + $0xa0] sm:$0xff]
                  %443 = vst [vmem:[%s431 + $0x28] sm:$0xff] %v442
                  %v444 = vld [vmem:[%s430 + $0xc0] sm:$0xff]
                  %445 = vst [vmem:[%s431 + $0x30] sm:$0xff] %v444
                  %v446 = vld [vmem:[%s430 + $0xe0] sm:$0xff]
                  %447 = vst [vmem:[%s431 + $0x38] sm:$0xff] %v446
                  %v448 = vld [vmem:[%s430 + $0x100] sm:$0xff]
                  %449 = vst [vmem:[%s431 + $0x40] sm:$0xff] %v448
                  %v450 = vld [vmem:[%s430 + $0x120] sm:$0xff]
                  %451 = vst [vmem:[%s431 + $0x48] sm:$0xff] %v450
                  %v452 = vld [vmem:[%s430 + $0x140] sm:$0xff]
                  %453 = vst [vmem:[%s431 + $0x50] sm:$0xff] %v452
                  %v454 = vld [vmem:[%s430 + $0x160] sm:$0xff]
                  %455 = vst [vmem:[%s431 + $0x58] sm:$0xff] %v454
                  %v456 = vld [vmem:[%s430 + $0x180] sm:$0xff]
                  %457 = vst [vmem:[%s431 + $0x60] sm:$0xff] %v456
                  %v458 = vld [vmem:[%s430 + $0x1a0] sm:$0xff]
                  %459 = vst [vmem:[%s431 + $0x68] sm:$0xff] %v458
                  %v460 = vld [vmem:[%s430 + $0x1c0] sm:$0xff]
                  %461 = vst [vmem:[%s431 + $0x70] sm:$0xff] %v460
                  %v462 = vld [vmem:[%s430 + $0x1e0] sm:$0xff]
                  %463 = vst [vmem:[%s431 + $0x78] sm:$0xff] %v462
                  %v464 = vld [vmem:[%s430 + $0x200] sm:$0xff]
                  %465 = vst [vmem:[%s431 + $0x80] sm:$0xff] %v464
                  %v466 = vld [vmem:[%s430 + $0x220] sm:$0xff]
                  %467 = vst [vmem:[%s431 + $0x88] sm:$0xff] %v466
                  %v468 = vld [vmem:[%s430 + $0x240] sm:$0xff]
                  %469 = vst [vmem:[%s431 + $0x90] sm:$0xff] %v468
                  %v470 = vld [vmem:[%s430 + $0x260] sm:$0xff]
                  %471 = vst [vmem:[%s431 + $0x98] sm:$0xff] %v470
                  %v472 = vld [vmem:[%s430 + $0x280] sm:$0xff]
                  %473 = vst [vmem:[%s431 + $0xa0] sm:$0xff] %v472
                  %v474 = vld [vmem:[%s430 + $0x2a0] sm:$0xff]
                  %475 = vst [vmem:[%s431 + $0xa8] sm:$0xff] %v474
                  %v476 = vld [vmem:[%s430 + $0x2c0] sm:$0xff]
                  %477 = vst [vmem:[%s431 + $0xb0] sm:$0xff] %v476
                  %v478 = vld [vmem:[%s430 + $0x2e0] sm:$0xff]
                  %479 = vst [vmem:[%s431 + $0xb8] sm:$0xff] %v478
                  %v480 = vld [vmem:[%s430 + $0x300] sm:$0xff]
                  %481 = vst [vmem:[%s431 + $0xc0] sm:$0xff] %v480
                  %v482 = vld [vmem:[%s430 + $0x320] sm:$0xff]
                  %483 = vst [vmem:[%s431 + $0xc8] sm:$0xff] %v482
                  %v484 = vld [vmem:[%s430 + $0x340] sm:$0xff]
                  %485 = vst [vmem:[%s431 + $0xd0] sm:$0xff] %v484
                  %v486 = vld [vmem:[%s430 + $0x360] sm:$0xff]
                  %487 = vst [vmem:[%s431 + $0xd8] sm:$0xff] %v486
                  %v488 = vld [vmem:[%s430 + $0x380] sm:$0xff]
                  %489 = vst [vmem:[%s431 + $0xe0] sm:$0xff] %v488
                  %v490 = vld [vmem:[%s430 + $0x3a0] sm:$0xff]
                  %491 = vst [vmem:[%s431 + $0xe8] sm:$0xff] %v490
                  %v492 = vld [vmem:[%s430 + $0x3c0] sm:$0xff]
                  %493 = vst [vmem:[%s431 + $0xf0] sm:$0xff] %v492
                  %v494 = vld [vmem:[%s430 + $0x3e0] sm:$0xff]
                  %495 = vst [vmem:[%s431 + $0xf8] sm:$0xff] %v494
                  %v496 = vld [vmem:[%s430 + $0x400] sm:$0xff]
                  %497 = vst [vmem:[%s431 + $0x100] sm:$0xff] %v496
                  %v498 = vld [vmem:[%s430 + $0x420] sm:$0xff]
                  %499 = vst [vmem:[%s431 + $0x108] sm:$0xff] %v498
                  %v500 = vld [vmem:[%s430 + $0x440] sm:$0xff]
                  %501 = vst [vmem:[%s431 + $0x110] sm:$0xff] %v500
                  %v502 = vld [vmem:[%s430 + $0x460] sm:$0xff]
                  %503 = vst [vmem:[%s431 + $0x118] sm:$0xff] %v502
                  %v504 = vld [vmem:[%s430 + $0x480] sm:$0xff]
                  %505 = vst [vmem:[%s431 + $0x120] sm:$0xff] %v504
                  %v506 = vld [vmem:[%s430 + $0x4a0] sm:$0xff]
                  %507 = vst [vmem:[%s431 + $0x128] sm:$0xff] %v506
                  %v508 = vld [vmem:[%s430 + $0x4c0] sm:$0xff]
                  %509 = vst [vmem:[%s431 + $0x130] sm:$0xff] %v508
                  %v510 = vld [vmem:[%s430 + $0x4e0] sm:$0xff]
                  %511 = vst [vmem:[%s431 + $0x138] sm:$0xff] %v510
                  %v512 = vld [vmem:[%s430 + $0x500] sm:$0xff]
                  %513 = vst [vmem:[%s431 + $0x140] sm:$0xff] %v512
                  %v514 = vld [vmem:[%s430 + $0x520] sm:$0xff]
                  %515 = vst [vmem:[%s431 + $0x148] sm:$0xff] %v514
                  %v516 = vld [vmem:[%s430 + $0x540] sm:$0xff]
                  %517 = vst [vmem:[%s431 + $0x150] sm:$0xff] %v516
                  %v518 = vld [vmem:[%s430 + $0x560] sm:$0xff]
                  %519 = vst [vmem:[%s431 + $0x158] sm:$0xff] %v518
                  %v520 = vld [vmem:[%s430 + $0x580] sm:$0xff]
                  %521 = vst [vmem:[%s431 + $0x160] sm:$0xff] %v520
                  %v522 = vld [vmem:[%s430 + $0x5a0] sm:$0xff]
                  %523 = vst [vmem:[%s431 + $0x168] sm:$0xff] %v522
                  %v524 = vld [vmem:[%s430 + $0x5c0] sm:$0xff]
                  %525 = vst [vmem:[%s431 + $0x170] sm:$0xff] %v524
                  %v526 = vld [vmem:[%s430 + $0x5e0] sm:$0xff]
                  %527 = vst [vmem:[%s431 + $0x178] sm:$0xff] %v526
                  %v528 = vld [vmem:[%s430 + $0x600] sm:$0xff]
                  %529 = vst [vmem:[%s431 + $0x180] sm:$0xff] %v528
                  %v530 = vld [vmem:[%s430 + $0x620] sm:$0xff]
                  %531 = vst [vmem:[%s431 + $0x188] sm:$0xff] %v530
                  %v532 = vld [vmem:[%s430 + $0x640] sm:$0xff]
                  %533 = vst [vmem:[%s431 + $0x190] sm:$0xff] %v532
                  %v534 = vld [vmem:[%s430 + $0x660] sm:$0xff]
                  %535 = vst [vmem:[%s431 + $0x198] sm:$0xff] %v534
                  %v536 = vld [vmem:[%s430 + $0x680] sm:$0xff]
                  %537 = vst [vmem:[%s431 + $0x1a0] sm:$0xff] %v536
                  %v538 = vld [vmem:[%s430 + $0x6a0] sm:$0xff]
                  %539 = vst [vmem:[%s431 + $0x1a8] sm:$0xff] %v538
                  %v540 = vld [vmem:[%s430 + $0x6c0] sm:$0xff]
                  %541 = vst [vmem:[%s431 + $0x1b0] sm:$0xff] %v540
                  %v542 = vld [vmem:[%s430 + $0x6e0] sm:$0xff]
                  %543 = vst [vmem:[%s431 + $0x1b8] sm:$0xff] %v542
                  %v544 = vld [vmem:[%s430 + $0x700] sm:$0xff]
                  %545 = vst [vmem:[%s431 + $0x1c0] sm:$0xff] %v544
                  %v546 = vld [vmem:[%s430 + $0x720] sm:$0xff]
                  %547 = vst [vmem:[%s431 + $0x1c8] sm:$0xff] %v546
                  %v548 = vld [vmem:[%s430 + $0x740] sm:$0xff]
                  %549 = vst [vmem:[%s431 + $0x1d0] sm:$0xff] %v548
                  %v550 = vld [vmem:[%s430 + $0x760] sm:$0xff]
                  %551 = vst [vmem:[%s431 + $0x1d8] sm:$0xff] %v550
                  %v552 = vld [vmem:[%s430 + $0x780] sm:$0xff]
                  %553 = vst [vmem:[%s431 + $0x1e0] sm:$0xff] %v552
                  %v554 = vld [vmem:[%s430 + $0x7a0] sm:$0xff]
                  %555 = vst [vmem:[%s431 + $0x1e8] sm:$0xff] %v554
                  %v556 = vld [vmem:[%s430 + $0x7c0] sm:$0xff]
                  %557 = vst [vmem:[%s431 + $0x1f0] sm:$0xff] %v556
                  %v558 = vld [vmem:[%s430 + $0x7e0] sm:$0xff]
                  %559 = vst [vmem:[%s431 + $0x1f8] sm:$0xff] %v558
                  %v560 = vld [vmem:[%s430 + $0x800] sm:$0xff]
                  %561 = vst [vmem:[%s431 + $0x200] sm:$0xff] %v560
                  %v562 = vld [vmem:[%s430 + $0x820] sm:$0xff]
                  %563 = vst [vmem:[%s431 + $0x208] sm:$0xff] %v562
                  %v564 = vld [vmem:[%s430 + $0x840] sm:$0xff]
                  %565 = vst [vmem:[%s431 + $0x210] sm:$0xff] %v564
                  %v566 = vld [vmem:[%s430 + $0x860] sm:$0xff]
                  %567 = vst [vmem:[%s431 + $0x218] sm:$0xff] %v566
                  %v568 = vld [vmem:[%s430 + $0x880] sm:$0xff]
                  %569 = vst [vmem:[%s431 + $0x220] sm:$0xff] %v568
                  %v570 = vld [vmem:[%s430 + $0x8a0] sm:$0xff]
                  %571 = vst [vmem:[%s431 + $0x228] sm:$0xff] %v570
                  %v572 = vld [vmem:[%s430 + $0x8c0] sm:$0xff]
                  %573 = vst [vmem:[%s431 + $0x230] sm:$0xff] %v572
                  %v574 = vld [vmem:[%s430 + $0x8e0] sm:$0xff]
                  %575 = vst [vmem:[%s431 + $0x238] sm:$0xff] %v574
                  %v576 = vld [vmem:[%s430 + $0x900] sm:$0xff]
                  %577 = vst [vmem:[%s431 + $0x240] sm:$0xff] %v576
                  %v578 = vld [vmem:[%s430 + $0x920] sm:$0xff]
                  %579 = vst [vmem:[%s431 + $0x248] sm:$0xff] %v578
                  %v580 = vld [vmem:[%s430 + $0x940] sm:$0xff]
                  %581 = vst [vmem:[%s431 + $0x250] sm:$0xff] %v580
                  %v582 = vld [vmem:[%s430 + $0x960] sm:$0xff]
                  %583 = vst [vmem:[%s431 + $0x258] sm:$0xff] %v582
                  %v584 = vld [vmem:[%s430 + $0x980] sm:$0xff]
                  %585 = vst [vmem:[%s431 + $0x260] sm:$0xff] %v584
                  %v586 = vld [vmem:[%s430 + $0x9a0] sm:$0xff]
                  %587 = vst [vmem:[%s431 + $0x268] sm:$0xff] %v586
                  %v588 = vld [vmem:[%s430 + $0x9c0] sm:$0xff]
                  %589 = vst [vmem:[%s431 + $0x270] sm:$0xff] %v588
                  %v590 = vld [vmem:[%s430 + $0x9e0] sm:$0xff]
                  %591 = vst [vmem:[%s431 + $0x278] sm:$0xff] %v590
                  %v592 = vld [vmem:[%s430 + $0xa00] sm:$0xff]
                  %593 = vst [vmem:[%s431 + $0x280] sm:$0xff] %v592
                  %v594 = vld [vmem:[%s430 + $0xa20] sm:$0xff]
                  %595 = vst [vmem:[%s431 + $0x288] sm:$0xff] %v594
                $region64: #{_lambda_.1} parent=58 // loop_footer
                  %s429 = sadd.s32 1, %s425
                $region65: #{_lambda_.1} parent=58 // loop_footer_branch
                  %424 = sbr.rel target = $region61
                $region66: #{_lambda_.1} parent=58 // loop_exit
                  _
              $region59: #{_lambda_.1} parent=43 // pred_fallthru
                _
              // Predicated region
              $region67: #{_lambda_.1} parent=43 // pred_check
                _
              $region68: #{_lambda_.1} parent=43 // pred_check_branch
                %597 = sbr.rel target = $region70
              $region69: #{_lambda_.1} parent=43 // pred_region
                _
              $region70: #{_lambda_.1} parent=43 // pred_fallthru
                _
            $region44: #{_lambda_.1} parent=39 // pred_fallthru
              _
            // Predicated region
            $region45: #{_lambda_.1} parent=39 // pred_check
              _
            $region46: #{_lambda_.1} parent=39 // pred_check_branch
              %247 = sbr.rel target = $region48
            $region47: #{_lambda_.1} parent=39 // pred_region
              %s249 = ssub.s32 256, 1
              loop: start=0, step=1, limit=1
              $region49: #{_lambda_.1} parent=47 // loop_pre_header
                _
              $region50: #{_lambda_.1} parent=47 // loop_header
                %s251 = sphi 0, %s255
                %p252 = scmp.ge.s32.totalorder %s251, 1
                %s256 = sphi %s241, %s241
                %s257 = sphi %s238, %s238
              $region51: #{_lambda_.1} parent=47 // loop_header_branch
                %254 = sbr.rel (%p252) target = $region55
              $region52: #{_lambda_.1} parent=47 // loop_body
                %v258 = vld [vmem:[%s256] sm:%s249]
                %259 = vst [vmem:[%s257] sm:%s249] %v258
                %v260 = vld [vmem:[%s256 + $0x20] sm:%s249]
                %261 = vst [vmem:[%s257 + $0x8] sm:%s249] %v260
                %v262 = vld [vmem:[%s256 + $0x40] sm:%s249]
                %263 = vst [vmem:[%s257 + $0x10] sm:%s249] %v262
                %v264 = vld [vmem:[%s256 + $0x60] sm:%s249]
                %265 = vst [vmem:[%s257 + $0x18] sm:%s249] %v264
                %v266 = vld [vmem:[%s256 + $0x80] sm:%s249]
                %267 = vst [vmem:[%s257 + $0x20] sm:%s249] %v266
                %v268 = vld [vmem:[%s256 + $0xa0] sm:%s249]
                %269 = vst [vmem:[%s257 + $0x28] sm:%s249] %v268
                %v270 = vld [vmem:[%s256 + $0xc0] sm:%s249]
                %271 = vst [vmem:[%s257 + $0x30] sm:%s249] %v270
                %v272 = vld [vmem:[%s256 + $0xe0] sm:%s249]
                %273 = vst [vmem:[%s257 + $0x38] sm:%s249] %v272
                %v274 = vld [vmem:[%s256 + $0x100] sm:%s249]
                %275 = vst [vmem:[%s257 + $0x40] sm:%s249] %v274
                %v276 = vld [vmem:[%s256 + $0x120] sm:%s249]
                %277 = vst [vmem:[%s257 + $0x48] sm:%s249] %v276
                %v278 = vld [vmem:[%s256 + $0x140] sm:%s249]
                %279 = vst [vmem:[%s257 + $0x50] sm:%s249] %v278
                %v280 = vld [vmem:[%s256 + $0x160] sm:%s249]
                %281 = vst [vmem:[%s257 + $0x58] sm:%s249] %v280
                %v282 = vld [vmem:[%s256 + $0x180] sm:%s249]
                %283 = vst [vmem:[%s257 + $0x60] sm:%s249] %v282
                %v284 = vld [vmem:[%s256 + $0x1a0] sm:%s249]
                %285 = vst [vmem:[%s257 + $0x68] sm:%s249] %v284
                %v286 = vld [vmem:[%s256 + $0x1c0] sm:%s249]
                %287 = vst [vmem:[%s257 + $0x70] sm:%s249] %v286
                %v288 = vld [vmem:[%s256 + $0x1e0] sm:%s249]
                %289 = vst [vmem:[%s257 + $0x78] sm:%s249] %v288
                %v290 = vld [vmem:[%s256 + $0x200] sm:%s249]
                %291 = vst [vmem:[%s257 + $0x80] sm:%s249] %v290
                %v292 = vld [vmem:[%s256 + $0x220] sm:%s249]
                %293 = vst [vmem:[%s257 + $0x88] sm:%s249] %v292
                %v294 = vld [vmem:[%s256 + $0x240] sm:%s249]
                %295 = vst [vmem:[%s257 + $0x90] sm:%s249] %v294
                %v296 = vld [vmem:[%s256 + $0x260] sm:%s249]
                %297 = vst [vmem:[%s257 + $0x98] sm:%s249] %v296
                %v298 = vld [vmem:[%s256 + $0x280] sm:%s249]
                %299 = vst [vmem:[%s257 + $0xa0] sm:%s249] %v298
                %v300 = vld [vmem:[%s256 + $0x2a0] sm:%s249]
                %301 = vst [vmem:[%s257 + $0xa8] sm:%s249] %v300
                %v302 = vld [vmem:[%s256 + $0x2c0] sm:%s249]
                %303 = vst [vmem:[%s257 + $0xb0] sm:%s249] %v302
                %v304 = vld [vmem:[%s256 + $0x2e0] sm:%s249]
                %305 = vst [vmem:[%s257 + $0xb8] sm:%s249] %v304
                %v306 = vld [vmem:[%s256 + $0x300] sm:%s249]
                %307 = vst [vmem:[%s257 + $0xc0] sm:%s249] %v306
                %v308 = vld [vmem:[%s256 + $0x320] sm:%s249]
                %309 = vst [vmem:[%s257 + $0xc8] sm:%s249] %v308
                %v310 = vld [vmem:[%s256 + $0x340] sm:%s249]
                %311 = vst [vmem:[%s257 + $0xd0] sm:%s249] %v310
                %v312 = vld [vmem:[%s256 + $0x360] sm:%s249]
                %313 = vst [vmem:[%s257 + $0xd8] sm:%s249] %v312
                %v314 = vld [vmem:[%s256 + $0x380] sm:%s249]
                %315 = vst [vmem:[%s257 + $0xe0] sm:%s249] %v314
                %v316 = vld [vmem:[%s256 + $0x3a0] sm:%s249]
                %317 = vst [vmem:[%s257 + $0xe8] sm:%s249] %v316
                %v318 = vld [vmem:[%s256 + $0x3c0] sm:%s249]
                %319 = vst [vmem:[%s257 + $0xf0] sm:%s249] %v318
                %v320 = vld [vmem:[%s256 + $0x3e0] sm:%s249]
                %321 = vst [vmem:[%s257 + $0xf8] sm:%s249] %v320
                %v322 = vld [vmem:[%s256 + $0x400] sm:%s249]
                %323 = vst [vmem:[%s257 + $0x100] sm:%s249] %v322
                %v324 = vld [vmem:[%s256 + $0x420] sm:%s249]
                %325 = vst [vmem:[%s257 + $0x108] sm:%s249] %v324
                %v326 = vld [vmem:[%s256 + $0x440] sm:%s249]
                %327 = vst [vmem:[%s257 + $0x110] sm:%s249] %v326
                %v328 = vld [vmem:[%s256 + $0x460] sm:%s249]
                %329 = vst [vmem:[%s257 + $0x118] sm:%s249] %v328
                %v330 = vld [vmem:[%s256 + $0x480] sm:%s249]
                %331 = vst [vmem:[%s257 + $0x120] sm:%s249] %v330
                %v332 = vld [vmem:[%s256 + $0x4a0] sm:%s249]
                %333 = vst [vmem:[%s257 + $0x128] sm:%s249] %v332
                %v334 = vld [vmem:[%s256 + $0x4c0] sm:%s249]
                %335 = vst [vmem:[%s257 + $0x130] sm:%s249] %v334
                %v336 = vld [vmem:[%s256 + $0x4e0] sm:%s249]
                %337 = vst [vmem:[%s257 + $0x138] sm:%s249] %v336
                %v338 = vld [vmem:[%s256 + $0x500] sm:%s249]
                %339 = vst [vmem:[%s257 + $0x140] sm:%s249] %v338
                %v340 = vld [vmem:[%s256 + $0x520] sm:%s249]
                %341 = vst [vmem:[%s257 + $0x148] sm:%s249] %v340
                %v342 = vld [vmem:[%s256 + $0x540] sm:%s249]
                %343 = vst [vmem:[%s257 + $0x150] sm:%s249] %v342
                %v344 = vld [vmem:[%s256 + $0x560] sm:%s249]
                %345 = vst [vmem:[%s257 + $0x158] sm:%s249] %v344
                %v346 = vld [vmem:[%s256 + $0x580] sm:%s249]
                %347 = vst [vmem:[%s257 + $0x160] sm:%s249] %v346
                %v348 = vld [vmem:[%s256 + $0x5a0] sm:%s249]
                %349 = vst [vmem:[%s257 + $0x168] sm:%s249] %v348
                %v350 = vld [vmem:[%s256 + $0x5c0] sm:%s249]
                %351 = vst [vmem:[%s257 + $0x170] sm:%s249] %v350
                %v352 = vld [vmem:[%s256 + $0x5e0] sm:%s249]
                %353 = vst [vmem:[%s257 + $0x178] sm:%s249] %v352
                %v354 = vld [vmem:[%s256 + $0x600] sm:%s249]
                %355 = vst [vmem:[%s257 + $0x180] sm:%s249] %v354
                %v356 = vld [vmem:[%s256 + $0x620] sm:%s249]
                %357 = vst [vmem:[%s257 + $0x188] sm:%s249] %v356
                %v358 = vld [vmem:[%s256 + $0x640] sm:%s249]
                %359 = vst [vmem:[%s257 + $0x190] sm:%s249] %v358
                %v360 = vld [vmem:[%s256 + $0x660] sm:%s249]
                %361 = vst [vmem:[%s257 + $0x198] sm:%s249] %v360
                %v362 = vld [vmem:[%s256 + $0x680] sm:%s249]
                %363 = vst [vmem:[%s257 + $0x1a0] sm:%s249] %v362
                %v364 = vld [vmem:[%s256 + $0x6a0] sm:%s249]
                %365 = vst [vmem:[%s257 + $0x1a8] sm:%s249] %v364
                %v366 = vld [vmem:[%s256 + $0x6c0] sm:%s249]
                %367 = vst [vmem:[%s257 + $0x1b0] sm:%s249] %v366
                %v368 = vld [vmem:[%s256 + $0x6e0] sm:%s249]
                %369 = vst [vmem:[%s257 + $0x1b8] sm:%s249] %v368
                %v370 = vld [vmem:[%s256 + $0x700] sm:%s249]
                %371 = vst [vmem:[%s257 + $0x1c0] sm:%s249] %v370
                %v372 = vld [vmem:[%s256 + $0x720] sm:%s249]
                %373 = vst [vmem:[%s257 + $0x1c8] sm:%s249] %v372
                %v374 = vld [vmem:[%s256 + $0x740] sm:%s249]
                %375 = vst [vmem:[%s257 + $0x1d0] sm:%s249] %v374
                %v376 = vld [vmem:[%s256 + $0x760] sm:%s249]
                %377 = vst [vmem:[%s257 + $0x1d8] sm:%s249] %v376
                %v378 = vld [vmem:[%s256 + $0x780] sm:%s249]
                %379 = vst [vmem:[%s257 + $0x1e0] sm:%s249] %v378
                %v380 = vld [vmem:[%s256 + $0x7a0] sm:%s249]
                %381 = vst [vmem:[%s257 + $0x1e8] sm:%s249] %v380
                %v382 = vld [vmem:[%s256 + $0x7c0] sm:%s249]
                %383 = vst [vmem:[%s257 + $0x1f0] sm:%s249] %v382
                %v384 = vld [vmem:[%s256 + $0x7e0] sm:%s249]
                %385 = vst [vmem:[%s257 + $0x1f8] sm:%s249] %v384
                %v386 = vld [vmem:[%s256 + $0x800] sm:%s249]
                %387 = vst [vmem:[%s257 + $0x200] sm:%s249] %v386
                %v388 = vld [vmem:[%s256 + $0x820] sm:%s249]
                %389 = vst [vmem:[%s257 + $0x208] sm:%s249] %v388
                %v390 = vld [vmem:[%s256 + $0x840] sm:%s249]
                %391 = vst [vmem:[%s257 + $0x210] sm:%s249] %v390
                %v392 = vld [vmem:[%s256 + $0x860] sm:%s249]
                %393 = vst [vmem:[%s257 + $0x218] sm:%s249] %v392
                %v394 = vld [vmem:[%s256 + $0x880] sm:%s249]
                %395 = vst [vmem:[%s257 + $0x220] sm:%s249] %v394
                %v396 = vld [vmem:[%s256 + $0x8a0] sm:%s249]
                %397 = vst [vmem:[%s257 + $0x228] sm:%s249] %v396
                %v398 = vld [vmem:[%s256 + $0x8c0] sm:%s249]
                %399 = vst [vmem:[%s257 + $0x230] sm:%s249] %v398
                %v400 = vld [vmem:[%s256 + $0x8e0] sm:%s249]
                %401 = vst [vmem:[%s257 + $0x238] sm:%s249] %v400
                %v402 = vld [vmem:[%s256 + $0x900] sm:%s249]
                %403 = vst [vmem:[%s257 + $0x240] sm:%s249] %v402
                %v404 = vld [vmem:[%s256 + $0x920] sm:%s249]
                %405 = vst [vmem:[%s257 + $0x248] sm:%s249] %v404
                %v406 = vld [vmem:[%s256 + $0x940] sm:%s249]
                %407 = vst [vmem:[%s257 + $0x250] sm:%s249] %v406
                %v408 = vld [vmem:[%s256 + $0x960] sm:%s249]
                %409 = vst [vmem:[%s257 + $0x258] sm:%s249] %v408
                %v410 = vld [vmem:[%s256 + $0x980] sm:%s249]
                %411 = vst [vmem:[%s257 + $0x260] sm:%s249] %v410
                %v412 = vld [vmem:[%s256 + $0x9a0] sm:%s249]
                %413 = vst [vmem:[%s257 + $0x268] sm:%s249] %v412
                %v414 = vld [vmem:[%s256 + $0x9c0] sm:%s249]
                %415 = vst [vmem:[%s257 + $0x270] sm:%s249] %v414
                %v416 = vld [vmem:[%s256 + $0x9e0] sm:%s249]
                %417 = vst [vmem:[%s257 + $0x278] sm:%s249] %v416
                %v418 = vld [vmem:[%s256 + $0xa00] sm:%s249]
                %419 = vst [vmem:[%s257 + $0x280] sm:%s249] %v418
                %v420 = vld [vmem:[%s256 + $0xa20] sm:%s249]
                %421 = vst [vmem:[%s257 + $0x288] sm:%s249] %v420
              $region53: #{_lambda_.1} parent=47 // loop_footer
                %s255 = sadd.s32 1, %s251
              $region54: #{_lambda_.1} parent=47 // loop_footer_branch
                %250 = sbr.rel target = $region50
              $region55: #{_lambda_.1} parent=47 // loop_exit
                _
            $region48: #{_lambda_.1} parent=39 // pred_fallthru
              _
          $region40: #{_lambda_.1} parent=35 // pred_fallthru
            _
          %598 = vnop
        $region36: #{_lambda_.1} parent=31 // pred_fallthru
          _
        // Predicated region
        $region71: #{_lambda_.1} parent=31 // pred_check
          %p599 = pneg %p143
        $region72: #{_lambda_.1} parent=31 // pred_check_branch
          %601 = sbr.rel (%p599) target = $region74
        $region73: #{_lambda_.1} parent=31 // pred_region
          %s602 = smul.u32 2, %s13
          %p603 = scmp.lt.s32.totalorder %s602, 7
          %s604 = scalar_select %p603, %s602, 7
          %s605 = smul.addr %s604, 4
          %s606 = scalar_lea.vmem %s5, %s605
          %s607 = smul.u32 2, %s13
        $region74: #{_lambda_.1} parent=31 // pred_fallthru
          _
        // Predicated region
        $region75: #{_lambda_.1} parent=31 // pred_check
          %p608 = pneg %p169
        $region76: #{_lambda_.1} parent=31 // pred_check_branch
          %610 = sbr.rel (%p608) target = $region78
        $region77: #{_lambda_.1} parent=31 // pred_region
          %s611 = sand.u32 %s159, 1
          %s612 = sand.u32 %s159, 1
          %s613 = smul.addr %s612, 48
          %s614 = scalar_lea.vmem [#allocation3], %s613
          %s615 = smul.u32 2, %s13
          %s616 = smul.addr %s615, 8
          %s617 = scalar_lea.vmem %s6, %s616
          // Predicated region
          $region79: #{_lambda_.1} parent=77 // pred_check
            _
          $region80: #{_lambda_.1} parent=77 // pred_check_branch
            %619 = sbr.rel (0) target = $region82
          $region81: #{_lambda_.1} parent=77 // pred_region
            // Predicated region
            $region83: #{_lambda_.1} parent=81 // pred_check
              _
            $region84: #{_lambda_.1} parent=81 // pred_check_branch
              %621 = sbr.rel (0) target = $region86
            $region85: #{_lambda_.1} parent=81 // pred_region
              loop: start=0, step=1, limit=1
              $region87: #{_lambda_.1} parent=85 // loop_pre_header
                _
              $region88: #{_lambda_.1} parent=85 // loop_header
                %s623 = sphi 0, %s627
                %p624 = scmp.ge.s32.totalorder %s623, 1
                %s628 = sphi %s617, %s617
                %s629 = sphi %s614, %s614
              $region89: #{_lambda_.1} parent=85 // loop_header_branch
                %626 = sbr.rel (%p624) target = $region93
              $region90: #{_lambda_.1} parent=85 // loop_body
                %v630 = vld [vmem:[%s628] sm:$0xff]
                %631 = vst [vmem:[%s629] sm:$0xff] %v630
                %v632 = vld [vmem:[%s628 + $0x8] sm:$0xff]
                %633 = vst [vmem:[%s629 + $0x8] sm:$0xff] %v632
                %v634 = vld [vmem:[%s628 + $0x40] sm:$0xff]
                %635 = vst [vmem:[%s629 + $0x10] sm:$0xff] %v634
                %v636 = vld [vmem:[%s628 + $0x48] sm:$0xff]
                %637 = vst [vmem:[%s629 + $0x18] sm:$0xff] %v636
                %v638 = vld [vmem:[%s628 + $0x80] sm:$0xff]
                %639 = vst [vmem:[%s629 + $0x20] sm:$0xff] %v638
                %v640 = vld [vmem:[%s628 + $0x88] sm:$0xff]
                %641 = vst [vmem:[%s629 + $0x28] sm:$0xff] %v640
              $region91: #{_lambda_.1} parent=85 // loop_footer
                %s627 = sadd.s32 1, %s623
              $region92: #{_lambda_.1} parent=85 // loop_footer_branch
                %622 = sbr.rel target = $region88
              $region93: #{_lambda_.1} parent=85 // loop_exit
                _
            $region86: #{_lambda_.1} parent=81 // pred_fallthru
              _
            // Predicated region
            $region94: #{_lambda_.1} parent=81 // pred_check
              _
            $region95: #{_lambda_.1} parent=81 // pred_check_branch
              %643 = sbr.rel target = $region97
            $region96: #{_lambda_.1} parent=81 // pred_region
              _
            $region97: #{_lambda_.1} parent=81 // pred_fallthru
              _
          $region82: #{_lambda_.1} parent=77 // pred_fallthru
            _
          %644 = vnop
        $region78: #{_lambda_.1} parent=31 // pred_fallthru
          _
      $region32: #{_lambda_.1} parent=5 // pred_fallthru
        _
      %p645 = scmp.le.s32.totalorder 1, %s13
      %p646 = scmp.lt.s32.totalorder %s13, 5
      %p647 = pnand %p645, %p646
      %p648 = pneg %p647
      // Predicated region
      $region98: #{_lambda_.1} parent=5 // pred_check
        _
      $region99: #{_lambda_.1} parent=5 // pred_check_branch
        %650 = sbr.rel (%p647) target = $region101
      $region100: #{_lambda_.1} parent=5 // pred_region
        %s651 = ssub.s32 %s13, 1
        %s652 = sand.u32 %s110, 1
        %s653 = sand.u32 %s110, 1
        %s654 = smul.addr %s653, 656
        %s655 = scalar_lea.vmem [#allocation2], %s654
        // Predicated region
        $region102: #{_lambda_.1} parent=100 // pred_check
          %p656 = pneg %p123
        $region103: #{_lambda_.1} parent=100 // pred_check_branch
          %658 = sbr.rel (%p656) target = $region105
        $region104: #{_lambda_.1} parent=100 // pred_region
          _
        $region105: #{_lambda_.1} parent=100 // pred_fallthru
          _
        %s659 = sand.u32 %s162, 1
        %s660 = sand.u32 %s162, 1
        %s661 = smul.addr %s660, 48
        %s662 = scalar_lea.vmem [#allocation3], %s661
        // Predicated region
        $region106: #{_lambda_.1} parent=100 // pred_check
          %p663 = pneg %p175
        $region107: #{_lambda_.1} parent=100 // pred_check_branch
          %665 = sbr.rel (%p663) target = $region109
        $region108: #{_lambda_.1} parent=100 // pred_region
          _
        $region109: #{_lambda_.1} parent=100 // pred_fallthru
          _
        %p666 = pneg %p34
        %p667 = pneg %p31
        %p668 = pneg %p55
        %p669 = pneg %p52
        %p670 = pneg %p76
        %p671 = pneg %p73
        %p672 = pneg %p97
        %p673 = pneg %p94
        %s674 = sand.u32 %s110, 1
        %s675 = sand.u32 %s110, 1
        %s676 = smul.addr %s675, 656
        %s677 = scalar_lea.vmem [#allocation2], %s676
        %p678 = pneg %p123
        %p679 = pneg %p120
        %s680 = smul.u32 2, %s18
        %p681 = scmp.lt.s32.totalorder %s680, 7
        %s682 = scalar_select %p681, %s680, 7
        %s683 = smul.addr %s682, 4
        %s684 = scalar_lea.vmem %s5, %s683
        %p685 = pneg %p149
        %p686 = pneg %p146
        %s687 = sand.u32 %s162, 1
        %s688 = sand.u32 %s162, 1
        %s689 = smul.addr %s688, 48
        %s690 = scalar_lea.vmem [#allocation3], %s689
        %p691 = pneg %p175
        %p692 = pneg %p172
        %p693 = pneg %p201
        %p694 = pneg %p198
        %s695 = smul.u32 2, %s18
        %p696 = scmp.lt.s32.totalorder %s695, 7
        %s697 = scalar_select %p696, %s695, 7
        %s698 = smul.addr %s697, 8
        %s699 = scalar_lea.vmem %s7, %s698
        %s700 = smul.u32 2, %s18
        %s701 = smul.u32 2, %s18
        %p702 = scmp.lt.s32.totalorder %s701, 7
        %s703 = scalar_select %p702, %s701, 7
        %s704 = smul.addr %s703, 4
        %s705 = scalar_lea.vmem %s5, %s704
        %s706 = smul.u32 2, %s18
        %s707 = smul.u32 2, %s18
        %s708 = smul.u32 2, %s18
        %p709 = scmp.lt.s32.totalorder %s708, 7
        %s710 = scalar_select %p709, %s708, 7
        %s711 = smul.addr %s710, 8
        %s712 = scalar_lea.vmem %s7, %s711
        %s713 = smul.u32 2, %s18
        %v715 = vld [vmem:[%s0] sm:$0x77]
        %v716 = vld [vmem:[%s0 + $0x8] sm:$0x77]
        %v717 = vld [vmem:[%s0 + $0x10] sm:$0x77]
        %v718 = vld [vmem:[%s655] sm:$0xff]
        %v719 = vld [vmem:[%s655 + $0x8] sm:$0xff]
        %v720 = vld [vmem:[%s655 + $0x10] sm:$0xff]
        %v721 = vld [vmem:[%s655 + $0x18] sm:$0xff]
        %v722 = vld [vmem:[%s655 + $0x20] sm:$0xff]
        %v723 = vld [vmem:[%s655 + $0x28] sm:$0xff]
        %v724 = vld [vmem:[%s655 + $0x30] sm:$0xff]
        %v725 = vld [vmem:[%s655 + $0x38] sm:$0xff]
        %v726 = vld [vmem:[%s655 + $0x40] sm:$0xff]
        %v727 = vld [vmem:[%s655 + $0x48] sm:$0xff]
        %v728 = vld [vmem:[%s655 + $0x50] sm:$0xff]
        %v729 = vld [vmem:[%s655 + $0x58] sm:$0xff]
        %v730 = vld [vmem:[%s655 + $0x60] sm:$0xff]
        %v731 = vld [vmem:[%s655 + $0x68] sm:$0xff]
        %v732 = vld [vmem:[%s655 + $0x70] sm:$0xff]
        %v733 = vld [vmem:[%s655 + $0x78] sm:$0xff]
        %v734 = vld [vmem:[%s655 + $0x80] sm:$0xff]
        %v735 = vld [vmem:[%s655 + $0x88] sm:$0xff]
        %v736 = vld [vmem:[%s655 + $0x90] sm:$0xff]
        %v737 = vld [vmem:[%s655 + $0x98] sm:$0xff]
        %v738 = vld [vmem:[%s655 + $0xa0] sm:$0xff]
        %v739 = vld [vmem:[%s655 + $0xa8] sm:$0xff]
        %v740 = vld [vmem:[%s655 + $0xb0] sm:$0xff]
        %v741 = vld [vmem:[%s655 + $0xb8] sm:$0xff]
        %v742 = vld [vmem:[%s655 + $0xc0] sm:$0xff]
        %v743 = vld [vmem:[%s655 + $0xc8] sm:$0xff]
        %v744 = vld [vmem:[%s655 + $0xd0] sm:$0xff]
        %v745 = vld [vmem:[%s655 + $0xd8] sm:$0xff]
        %v746 = vld [vmem:[%s655 + $0xe0] sm:$0xff]
        %v747 = vld [vmem:[%s655 + $0xe8] sm:$0xff]
        %v748 = vld [vmem:[%s655 + $0xf0] sm:$0xff]
        %v749 = vld [vmem:[%s655 + $0xf8] sm:$0xff]
        %v750 = vld [vmem:[%s655 + $0x100] sm:$0xff]
        %v751 = vld [vmem:[%s655 + $0x108] sm:$0xff]
        %v752 = vld [vmem:[%s655 + $0x110] sm:$0xff]
        %v753 = vld [vmem:[%s655 + $0x118] sm:$0xff]
        %v754 = vld [vmem:[%s655 + $0x120] sm:$0xff]
        %v755 = vld [vmem:[%s655 + $0x128] sm:$0xff]
        %v756 = vld [vmem:[%s655 + $0x130] sm:$0xff]
        %v757 = vld [vmem:[%s655 + $0x138] sm:$0xff]
        %v758 = vld [vmem:[%s655 + $0x140] sm:$0xff]
        %v759 = vld [vmem:[%s655 + $0x148] sm:$0xff]
        %v760 = vld [vmem:[%s655 + $0x150] sm:$0xff]
        %v761 = vld [vmem:[%s655 + $0x158] sm:$0xff]
        %v762 = vld [vmem:[%s655 + $0x160] sm:$0xff]
        %v763 = vld [vmem:[%s655 + $0x168] sm:$0xff]
        %v764 = vld [vmem:[%s655 + $0x170] sm:$0xff]
        %v765 = vld [vmem:[%s655 + $0x178] sm:$0xff]
        %v766 = vld [vmem:[%s655 + $0x180] sm:$0xff]
        %v767 = vld [vmem:[%s655 + $0x188] sm:$0xff]
        %v768 = vld [vmem:[%s655 + $0x190] sm:$0xff]
        %v769 = vld [vmem:[%s655 + $0x198] sm:$0xff]
        %v770 = vld [vmem:[%s655 + $0x1a0] sm:$0xff]
        %v771 = vld [vmem:[%s655 + $0x1a8] sm:$0xff]
        %v772 = vld [vmem:[%s655 + $0x1b0] sm:$0xff]
        %v773 = vld [vmem:[%s655 + $0x1b8] sm:$0xff]
        %v774 = vld [vmem:[%s655 + $0x1c0] sm:$0xff]
        %v775 = vld [vmem:[%s655 + $0x1c8] sm:$0xff]
        %v776 = vld [vmem:[%s655 + $0x1d0] sm:$0xff]
        %v777 = vld [vmem:[%s655 + $0x1d8] sm:$0xff]
        %v778 = vld [vmem:[%s655 + $0x1e0] sm:$0xff]
        %v779 = vld [vmem:[%s655 + $0x1e8] sm:$0xff]
        %v780 = vld [vmem:[%s655 + $0x1f0] sm:$0xff]
        %v781 = vld [vmem:[%s655 + $0x1f8] sm:$0xff]
        %v782 = vld [vmem:[%s655 + $0x200] sm:$0xff]
        %v783 = vld [vmem:[%s655 + $0x208] sm:$0xff]
        %v784 = vld [vmem:[%s655 + $0x210] sm:$0xff]
        %v785 = vld [vmem:[%s655 + $0x218] sm:$0xff]
        %v786 = vld [vmem:[%s655 + $0x220] sm:$0xff]
        %v787 = vld [vmem:[%s655 + $0x228] sm:$0xff]
        %v788 = vld [vmem:[%s655 + $0x230] sm:$0xff]
        %v789 = vld [vmem:[%s655 + $0x238] sm:$0xff]
        %v790 = vld [vmem:[%s655 + $0x240] sm:$0xff]
        %v791 = vld [vmem:[%s655 + $0x248] sm:$0xff]
        %v792 = vld [vmem:[%s655 + $0x250] sm:$0xff]
        %v793 = vld [vmem:[%s655 + $0x258] sm:$0xff]
        %v794 = vld [vmem:[%s655 + $0x260] sm:$0xff]
        %v795 = vld [vmem:[%s655 + $0x268] sm:$0xff]
        %v796 = vld [vmem:[%s655 + $0x270] sm:$0xff]
        %v797 = vld [vmem:[%s655 + $0x278] sm:$0xff]
        %v798 = vld [vmem:[%s655 + $0x280] sm:$0xff]
        %v799 = vld [vmem:[%s655 + $0x288] sm:$0x33]
        %v800 = vld [vmem:[%s1] sm:$0x3f]
        %v801 = vld [vmem:[%s705] sm:$0x77]
        %803 = vst [vmem:[#allocation1] ss:$2 sm:$0xff] %v801
        %v804 = vld.sshfl [vmem:[#allocation1] sm:$0xff pattern:$0x75316420]
        %v805 = vld.sshfl [vmem:[#allocation1 + $0x8] sm:$0xff pattern:$0x75316420]
        %vm806 = vcmask 23552
        %v808 = vsel %vm806, %v800, 0
        %vm810 = vcmask 1042432
        %v811 = vsel %vm810, %v804, 0
        %v813 = vsel %vm810, %v805, 0
        %815 = vmatpush.msra.mxu0 0.0
        %816 = vmatpush.msra.mxu0 0.0
        %817 = vmatpush.msra.mxu0 0.0
        %818 = vmatpush.msra.mxu0 0.0
        %819 = vmatpush.msra.mxu0 0.0
        %820 = vmatpush.msra.mxu0 0.0
        %821 = vmatpush.msra.mxu0 0.0
        %822 = vmatpush.msra.mxu0 0.0
        %823 = vmatpush.msra.mxu0 0.0
        %824 = vmatpush.msra.mxu0 0.0
        %825 = vmatpush.msra.mxu0 0.0
        %826 = vmatpush.msra.mxu0 0.0
        %827 = vmatpush.msra.mxu0 0.0
        %828 = vmatpush.msra.mxu0 0.0
        %829 = vmatpush.msra.mxu0 0.0
        %830 = vmatpush.msra.mxu0 %v811
        %831 = vmatmul.f32.gmra.mxu0 %v808
        %v832 = vpop.f32.mrf.mxu0
        %v833 = vadd.f32 0.0, %v832
        %834 = vdwg.mxu0
        %835 = vmatpush.msra.mxu0 0.0
        %836 = vmatpush.msra.mxu0 0.0
        %837 = vmatpush.msra.mxu0 0.0
        %838 = vmatpush.msra.mxu0 0.0
        %839 = vmatpush.msra.mxu0 0.0
        %840 = vmatpush.msra.mxu0 0.0
        %841 = vmatpush.msra.mxu0 0.0
        %842 = vmatpush.msra.mxu0 0.0
        %843 = vmatpush.msra.mxu0 0.0
        %844 = vmatpush.msra.mxu0 0.0
        %845 = vmatpush.msra.mxu0 0.0
        %846 = vmatpush.msra.mxu0 0.0
        %847 = vmatpush.msra.mxu0 0.0
        %848 = vmatpush.msra.mxu0 0.0
        %849 = vmatpush.msra.mxu0 0.0
        %850 = vmatpush.msra.mxu0 %v813
        %851 = vmatmul.f32.gmra.mxu0 %v808
        %v852 = vpop.f32.mrf.mxu0
        %v853 = vadd.f32 0.0, %v852
        %854 = vdwg.mxu0
        %v858 = vunpack.c.l.b16 %v715
        %v859 = vunpack.c.h.b16 %v715
        %v860 = vunpack.c.l.b16 %v716
        %v861 = vunpack.c.h.b16 %v716
        %v862 = vunpack.c.l.b16 %v717
        %v863 = vunpack.c.h.b16 %v717
        %v864 = vpack.c.b16 %v858, %v858
        %v865 = vpack.c.b16 %v859, %v859
        %v866 = vpack.c.b16 %v860, %v860
        %v867 = vpack.c.b16 %v861, %v861
        %v868 = vpack.c.b16 %v862, %v862
        %v869 = vpack.c.b16 %v863, %v863
        %v957 = vunpack.c.l.b16 %v718
        %v958 = vunpack.c.h.b16 %v718
        %v959 = vunpack.c.l.b16 %v719
        %v960 = vunpack.c.h.b16 %v719
        %v961 = vunpack.c.l.b16 %v720
        %v962 = vunpack.c.h.b16 %v720
        %v963 = vunpack.c.l.b16 %v721
        %v964 = vunpack.c.h.b16 %v721
        %v965 = vunpack.c.l.b16 %v722
        %v966 = vunpack.c.h.b16 %v722
        %v967 = vunpack.c.l.b16 %v723
        %v968 = vunpack.c.h.b16 %v723
        %v969 = vunpack.c.l.b16 %v724
        %v970 = vunpack.c.h.b16 %v724
        %v971 = vunpack.c.l.b16 %v725
        %v972 = vunpack.c.h.b16 %v725
        %v973 = vunpack.c.l.b16 %v726
        %v974 = vunpack.c.h.b16 %v726
        %v975 = vunpack.c.l.b16 %v727
        %v976 = vunpack.c.h.b16 %v727
        %v977 = vunpack.c.l.b16 %v728
        %v978 = vunpack.c.h.b16 %v728
        %v979 = vunpack.c.l.b16 %v729
        %v980 = vunpack.c.h.b16 %v729
        %v981 = vunpack.c.l.b16 %v730
        %v982 = vunpack.c.h.b16 %v730
        %v983 = vunpack.c.l.b16 %v731
        %v984 = vunpack.c.h.b16 %v731
        %v985 = vunpack.c.l.b16 %v732
        %v986 = vunpack.c.h.b16 %v732
        %v987 = vunpack.c.l.b16 %v733
        %v988 = vunpack.c.h.b16 %v733
        %v989 = vunpack.c.l.b16 %v734
        %v990 = vunpack.c.h.b16 %v734
        %v991 = vunpack.c.l.b16 %v735
        %v992 = vunpack.c.h.b16 %v735
        %v993 = vunpack.c.l.b16 %v736
        %v994 = vunpack.c.h.b16 %v736
        %v995 = vunpack.c.l.b16 %v737
        %v996 = vunpack.c.h.b16 %v737
        %v997 = vunpack.c.l.b16 %v738
        %v998 = vunpack.c.h.b16 %v738
        %v999 = vunpack.c.l.b16 %v739
        %v1000 = vunpack.c.h.b16 %v739
        %v1001 = vunpack.c.l.b16 %v740
        %v1002 = vunpack.c.h.b16 %v740
        %v1003 = vunpack.c.l.b16 %v741
        %v1004 = vunpack.c.h.b16 %v741
        %v1005 = vunpack.c.l.b16 %v742
        %v1006 = vunpack.c.h.b16 %v742
        %v1007 = vunpack.c.l.b16 %v743
        %v1008 = vunpack.c.h.b16 %v743
        %v1009 = vunpack.c.l.b16 %v744
        %v1010 = vunpack.c.h.b16 %v744
        %v1011 = vunpack.c.l.b16 %v745
        %v1012 = vunpack.c.h.b16 %v745
        %v1013 = vunpack.c.l.b16 %v746
        %v1014 = vunpack.c.h.b16 %v746
        %v1015 = vunpack.c.l.b16 %v747
        %v1016 = vunpack.c.h.b16 %v747
        %v1017 = vunpack.c.l.b16 %v748
        %v1018 = vunpack.c.h.b16 %v748
        %v1019 = vunpack.c.l.b16 %v749
        %v1020 = vunpack.c.h.b16 %v749
        %v1021 = vunpack.c.l.b16 %v750
        %v1022 = vunpack.c.h.b16 %v750
        %v1023 = vunpack.c.l.b16 %v751
        %v1024 = vunpack.c.h.b16 %v751
        %v1025 = vunpack.c.l.b16 %v752
        %v1026 = vunpack.c.h.b16 %v752
        %v1027 = vunpack.c.l.b16 %v753
        %v1028 = vunpack.c.h.b16 %v753
        %v1029 = vunpack.c.l.b16 %v754
        %v1030 = vunpack.c.h.b16 %v754
        %v1031 = vunpack.c.l.b16 %v755
        %v1032 = vunpack.c.h.b16 %v755
        %v1033 = vunpack.c.l.b16 %v756
        %v1034 = vunpack.c.h.b16 %v756
        %v1035 = vunpack.c.l.b16 %v757
        %v1036 = vunpack.c.h.b16 %v757
        %v1037 = vunpack.c.l.b16 %v758
        %v1038 = vunpack.c.h.b16 %v758
        %v1039 = vunpack.c.l.b16 %v759
        %v1040 = vunpack.c.h.b16 %v759
        %v1041 = vunpack.c.l.b16 %v760
        %v1042 = vunpack.c.h.b16 %v760
        %v1043 = vunpack.c.l.b16 %v761
        %v1044 = vunpack.c.h.b16 %v761
        %v1045 = vunpack.c.l.b16 %v762
        %v1046 = vunpack.c.h.b16 %v762
        %v1047 = vunpack.c.l.b16 %v763
        %v1048 = vunpack.c.h.b16 %v763
        %v1049 = vunpack.c.l.b16 %v764
        %v1050 = vunpack.c.h.b16 %v764
        %v1051 = vunpack.c.l.b16 %v765
        %v1052 = vunpack.c.h.b16 %v765
        %v1053 = vunpack.c.l.b16 %v766
        %v1054 = vunpack.c.h.b16 %v766
        %v1055 = vunpack.c.l.b16 %v767
        %v1056 = vunpack.c.h.b16 %v767
        %v1057 = vunpack.c.l.b16 %v768
        %v1058 = vunpack.c.h.b16 %v768
        %v1059 = vunpack.c.l.b16 %v769
        %v1060 = vunpack.c.h.b16 %v769
        %v1061 = vunpack.c.l.b16 %v770
        %v1062 = vunpack.c.h.b16 %v770
        %v1063 = vunpack.c.l.b16 %v771
        %v1064 = vunpack.c.h.b16 %v771
        %v1065 = vunpack.c.l.b16 %v772
        %v1066 = vunpack.c.h.b16 %v772
        %v1067 = vunpack.c.l.b16 %v773
        %v1068 = vunpack.c.h.b16 %v773
        %v1069 = vunpack.c.l.b16 %v774
        %v1070 = vunpack.c.h.b16 %v774
        %v1071 = vunpack.c.l.b16 %v775
        %v1072 = vunpack.c.h.b16 %v775
        %v1073 = vunpack.c.l.b16 %v776
        %v1074 = vunpack.c.h.b16 %v776
        %v1075 = vunpack.c.l.b16 %v777
        %v1076 = vunpack.c.h.b16 %v777
        %v1077 = vunpack.c.l.b16 %v778
        %v1078 = vunpack.c.h.b16 %v778
        %v1079 = vunpack.c.l.b16 %v779
        %v1080 = vunpack.c.h.b16 %v779
        %v1081 = vunpack.c.l.b16 %v780
        %v1082 = vunpack.c.h.b16 %v780
        %v1083 = vunpack.c.l.b16 %v781
        %v1084 = vunpack.c.h.b16 %v781
        %v1085 = vunpack.c.l.b16 %v782
        %v1086 = vunpack.c.h.b16 %v782
        %v1087 = vunpack.c.l.b16 %v783
        %v1088 = vunpack.c.h.b16 %v783
        %v1089 = vunpack.c.l.b16 %v784
        %v1090 = vunpack.c.h.b16 %v784
        %v1091 = vunpack.c.l.b16 %v785
        %v1092 = vunpack.c.h.b16 %v785
        %v1093 = vunpack.c.l.b16 %v786
        %v1094 = vunpack.c.h.b16 %v786
        %v1095 = vunpack.c.l.b16 %v787
        %v1096 = vunpack.c.h.b16 %v787
        %v1097 = vunpack.c.l.b16 %v788
        %v1098 = vunpack.c.h.b16 %v788
        %v1099 = vunpack.c.l.b16 %v789
        %v1100 = vunpack.c.h.b16 %v789
        %v1101 = vunpack.c.l.b16 %v790
        %v1102 = vunpack.c.h.b16 %v790
        %v1103 = vunpack.c.l.b16 %v791
        %v1104 = vunpack.c.h.b16 %v791
        %v1105 = vunpack.c.l.b16 %v792
        %v1106 = vunpack.c.h.b16 %v792
        %v1107 = vunpack.c.l.b16 %v793
        %v1108 = vunpack.c.h.b16 %v793
        %v1109 = vunpack.c.l.b16 %v794
        %v1110 = vunpack.c.h.b16 %v794
        %v1111 = vunpack.c.l.b16 %v795
        %v1112 = vunpack.c.h.b16 %v795
        %v1113 = vunpack.c.l.b16 %v796
        %v1114 = vunpack.c.h.b16 %v796
        %v1115 = vunpack.c.l.b16 %v797
        %v1116 = vunpack.c.h.b16 %v797
        %v1117 = vunpack.c.l.b16 %v798
        %v1118 = vunpack.c.h.b16 %v798
        %v1119 = vunpack.c.l.b16 %v799
        %v1120 = vunpack.c.h.b16 %v799
        %v1121 = vpack.c.b16 %v959, %v957
        %v1122 = vpack.c.b16 %v960, %v958
        %v1123 = vpack.c.b16 %v963, %v961
        %v1124 = vpack.c.b16 %v964, %v962
        %v1125 = vpack.c.b16 %v967, %v965
        %v1126 = vpack.c.b16 %v968, %v966
        %v1127 = vpack.c.b16 %v971, %v969
        %v1128 = vpack.c.b16 %v972, %v970
        %v1129 = vpack.c.b16 %v975, %v973
        %v1130 = vpack.c.b16 %v976, %v974
        %v1131 = vpack.c.b16 %v979, %v977
        %v1132 = vpack.c.b16 %v980, %v978
        %v1133 = vpack.c.b16 %v983, %v981
        %v1134 = vpack.c.b16 %v984, %v982
        %v1135 = vpack.c.b16 %v987, %v985
        %v1136 = vpack.c.b16 %v988, %v986
        %v1137 = vpack.c.b16 %v991, %v989
        %v1138 = vpack.c.b16 %v992, %v990
        %v1139 = vpack.c.b16 %v995, %v993
        %v1140 = vpack.c.b16 %v996, %v994
        %v1141 = vpack.c.b16 %v999, %v997
        %v1142 = vpack.c.b16 %v1000, %v998
        %v1143 = vpack.c.b16 %v1003, %v1001
        %v1144 = vpack.c.b16 %v1004, %v1002
        %v1145 = vpack.c.b16 %v1007, %v1005
        %v1146 = vpack.c.b16 %v1008, %v1006
        %v1147 = vpack.c.b16 %v1011, %v1009
        %v1148 = vpack.c.b16 %v1012, %v1010
        %v1149 = vpack.c.b16 %v1015, %v1013
        %v1150 = vpack.c.b16 %v1016, %v1014
        %v1151 = vpack.c.b16 %v1019, %v1017
        %v1152 = vpack.c.b16 %v1020, %v1018
        %v1153 = vpack.c.b16 %v1023, %v1021
        %v1154 = vpack.c.b16 %v1024, %v1022
        %v1155 = vpack.c.b16 %v1027, %v1025
        %v1156 = vpack.c.b16 %v1028, %v1026
        %v1157 = vpack.c.b16 %v1031, %v1029
        %v1158 = vpack.c.b16 %v1032, %v1030
        %v1159 = vpack.c.b16 %v1035, %v1033
        %v1160 = vpack.c.b16 %v1036, %v1034
        %v1161 = vpack.c.b16 %v1039, %v1037
        %v1162 = vpack.c.b16 %v1040, %v1038
        %v1163 = vpack.c.b16 %v1043, %v1041
        %v1164 = vpack.c.b16 %v1044, %v1042
        %v1165 = vpack.c.b16 %v1047, %v1045
        %v1166 = vpack.c.b16 %v1048, %v1046
        %v1167 = vpack.c.b16 %v1051, %v1049
        %v1168 = vpack.c.b16 %v1052, %v1050
        %v1169 = vpack.c.b16 %v1055, %v1053
        %v1170 = vpack.c.b16 %v1056, %v1054
        %v1171 = vpack.c.b16 %v1059, %v1057
        %v1172 = vpack.c.b16 %v1060, %v1058
        %v1173 = vpack.c.b16 %v1063, %v1061
        %v1174 = vpack.c.b16 %v1064, %v1062
        %v1175 = vpack.c.b16 %v1067, %v1065
        %v1176 = vpack.c.b16 %v1068, %v1066
        %v1177 = vpack.c.b16 %v1071, %v1069
        %v1178 = vpack.c.b16 %v1072, %v1070
        %v1179 = vpack.c.b16 %v1075, %v1073
        %v1180 = vpack.c.b16 %v1076, %v1074
        %v1181 = vpack.c.b16 %v1079, %v1077
        %v1182 = vpack.c.b16 %v1080, %v1078
        %v1183 = vpack.c.b16 %v1083, %v1081
        %v1184 = vpack.c.b16 %v1084, %v1082
        %v1185 = vpack.c.b16 %v1087, %v1085
        %v1186 = vpack.c.b16 %v1088, %v1086
        %v1187 = vpack.c.b16 %v1091, %v1089
        %v1188 = vpack.c.b16 %v1092, %v1090
        %v1189 = vpack.c.b16 %v1095, %v1093
        %v1190 = vpack.c.b16 %v1096, %v1094
        %v1191 = vpack.c.b16 %v1099, %v1097
        %v1192 = vpack.c.b16 %v1100, %v1098
        %v1193 = vpack.c.b16 %v1103, %v1101
        %v1194 = vpack.c.b16 %v1104, %v1102
        %v1195 = vpack.c.b16 %v1107, %v1105
        %v1196 = vpack.c.b16 %v1108, %v1106
        %v1197 = vpack.c.b16 %v1111, %v1109
        %v1198 = vpack.c.b16 %v1112, %v1110
        %v1199 = vpack.c.b16 %v1115, %v1113
        %v1200 = vpack.c.b16 %v1116, %v1114
        %v1201 = vpack.c.b16 %v1119, %v1117
        %v1202 = vpack.c.b16 %v1120, %v1118
        %vm1283 = vcmask 89088
        %v1285 = vsel %vm1283, %v869, 0
        %vm1287 = vcmask 1044480
        %vm1288 = vcmask 1045504
        %v1289 = vsel %vm1287, 4294967295, 65535
        %v1290 = vsel %vm1288, %v1289, 0
        %v1292 = vand.u32 %v1201, %v1290
        %v1295 = vand.u32 %v1202, %v1290
        %1297 = vmatpush.bf16.msra.mxu0 %v1135
        %1298 = vmatpush.bf16.msra.mxu0 %v1133
        %1299 = vmatpush.bf16.msra.mxu0 %v1131
        %1300 = vmatpush.bf16.msra.mxu0 %v1129
        %1301 = vmatpush.bf16.msra.mxu0 %v1127
        %1302 = vmatpush.bf16.msra.mxu0 %v1125
        %1303 = vmatpush.bf16.msra.mxu0 %v1123
        %1304 = vmatpush.bf16.msra.mxu0 %v1121
        %1305 = vmatmul.bf16.gmra.mxu0 %v864
        %v1306 = vpop.f32.mrf.mxu0
        %v1307 = vadd.f32 %v833, %v1306
        %v1308 = vpop.f32.mrf.mxu0
        %1309 = vdwg.mxu0
        %1310 = vmatpush.bf16.msra.mxu0 %v1151
        %1311 = vmatpush.bf16.msra.mxu0 %v1149
        %1312 = vmatpush.bf16.msra.mxu0 %v1147
        %1313 = vmatpush.bf16.msra.mxu0 %v1145
        %1314 = vmatpush.bf16.msra.mxu0 %v1143
        %1315 = vmatpush.bf16.msra.mxu0 %v1141
        %1316 = vmatpush.bf16.msra.mxu0 %v1139
        %1317 = vmatpush.bf16.msra.mxu0 %v1137
        %1318 = vmatmul.bf16.gmra.mxu0 %v865
        %v1319 = vpop.f32.mrf.mxu0
        %v1320 = vadd.f32 %v1307, %v1319
        %v1321 = vpop.f32.mrf.mxu0
        %1322 = vdwg.mxu0
        %1323 = vmatpush.bf16.msra.mxu0 %v1167
        %1324 = vmatpush.bf16.msra.mxu0 %v1165
        %1325 = vmatpush.bf16.msra.mxu0 %v1163
        %1326 = vmatpush.bf16.msra.mxu0 %v1161
        %1327 = vmatpush.bf16.msra.mxu0 %v1159
        %1328 = vmatpush.bf16.msra.mxu0 %v1157
        %1329 = vmatpush.bf16.msra.mxu0 %v1155
        %1330 = vmatpush.bf16.msra.mxu0 %v1153
        %1331 = vmatmul.bf16.gmra.mxu0 %v866
        %v1332 = vpop.f32.mrf.mxu0
        %v1333 = vadd.f32 %v1320, %v1332
        %v1334 = vpop.f32.mrf.mxu0
        %1335 = vdwg.mxu0
        %1336 = vmatpush.bf16.msra.mxu0 %v1183
        %1337 = vmatpush.bf16.msra.mxu0 %v1181
        %1338 = vmatpush.bf16.msra.mxu0 %v1179
        %1339 = vmatpush.bf16.msra.mxu0 %v1177
        %1340 = vmatpush.bf16.msra.mxu0 %v1175
        %1341 = vmatpush.bf16.msra.mxu0 %v1173
        %1342 = vmatpush.bf16.msra.mxu0 %v1171
        %1343 = vmatpush.bf16.msra.mxu0 %v1169
        %1344 = vmatmul.bf16.gmra.mxu0 %v867
        %v1345 = vpop.f32.mrf.mxu0
        %v1346 = vadd.f32 %v1333, %v1345
        %v1347 = vpop.f32.mrf.mxu0
        %1348 = vdwg.mxu0
        %1349 = vmatpush.bf16.msra.mxu0 %v1199
        %1350 = vmatpush.bf16.msra.mxu0 %v1197
        %1351 = vmatpush.bf16.msra.mxu0 %v1195
        %1352 = vmatpush.bf16.msra.mxu0 %v1193
        %1353 = vmatpush.bf16.msra.mxu0 %v1191
        %1354 = vmatpush.bf16.msra.mxu0 %v1189
        %1355 = vmatpush.bf16.msra.mxu0 %v1187
        %1356 = vmatpush.bf16.msra.mxu0 %v1185
        %1357 = vmatmul.bf16.gmra.mxu0 %v868
        %v1358 = vpop.f32.mrf.mxu0
        %v1359 = vadd.f32 %v1346, %v1358
        %v1360 = vpop.f32.mrf.mxu0
        %1361 = vdwg.mxu0
        %1362 = vmatpush.bf16.msra.mxu0 0
        %1363 = vmatpush.bf16.msra.mxu0 0
        %1364 = vmatpush.bf16.msra.mxu0 0
        %1365 = vmatpush.bf16.msra.mxu0 0
        %1366 = vmatpush.bf16.msra.mxu0 0
        %1367 = vmatpush.bf16.msra.mxu0 0
        %1368 = vmatpush.bf16.msra.mxu0 0
        %1369 = vmatpush.bf16.msra.mxu0 %v1292
        %1370 = vmatmul.bf16.gmra.mxu0 %v1285
        %v1371 = vpop.f32.mrf.mxu0
        %v1372 = vadd.f32 %v1359, %v1371
        %v1373 = vpop.f32.mrf.mxu0
        %1374 = vdwg.mxu0
        %1375 = vmatpush.bf16.msra.mxu0 %v1136
        %1376 = vmatpush.bf16.msra.mxu0 %v1134
        %1377 = vmatpush.bf16.msra.mxu0 %v1132
        %1378 = vmatpush.bf16.msra.mxu0 %v1130
        %1379 = vmatpush.bf16.msra.mxu0 %v1128
        %1380 = vmatpush.bf16.msra.mxu0 %v1126
        %1381 = vmatpush.bf16.msra.mxu0 %v1124
        %1382 = vmatpush.bf16.msra.mxu0 %v1122
        %1383 = vmatmul.bf16.gmra.mxu0 %v864
        %v1384 = vpop.f32.mrf.mxu0
        %v1385 = vadd.f32 %v853, %v1384
        %v1386 = vpop.f32.mrf.mxu0
        %1387 = vdwg.mxu0
        %1388 = vmatpush.bf16.msra.mxu0 %v1152
        %1389 = vmatpush.bf16.msra.mxu0 %v1150
        %1390 = vmatpush.bf16.msra.mxu0 %v1148
        %1391 = vmatpush.bf16.msra.mxu0 %v1146
        %1392 = vmatpush.bf16.msra.mxu0 %v1144
        %1393 = vmatpush.bf16.msra.mxu0 %v1142
        %1394 = vmatpush.bf16.msra.mxu0 %v1140
        %1395 = vmatpush.bf16.msra.mxu0 %v1138
        %1396 = vmatmul.bf16.gmra.mxu0 %v865
        %v1397 = vpop.f32.mrf.mxu0
        %v1398 = vadd.f32 %v1385, %v1397
        %v1399 = vpop.f32.mrf.mxu0
        %1400 = vdwg.mxu0
        %1401 = vmatpush.bf16.msra.mxu0 %v1168
        %1402 = vmatpush.bf16.msra.mxu0 %v1166
        %1403 = vmatpush.bf16.msra.mxu0 %v1164
        %1404 = vmatpush.bf16.msra.mxu0 %v1162
        %1405 = vmatpush.bf16.msra.mxu0 %v1160
        %1406 = vmatpush.bf16.msra.mxu0 %v1158
        %1407 = vmatpush.bf16.msra.mxu0 %v1156
        %1408 = vmatpush.bf16.msra.mxu0 %v1154
        %1409 = vmatmul.bf16.gmra.mxu0 %v866
        %v1410 = vpop.f32.mrf.mxu0
        %v1411 = vadd.f32 %v1398, %v1410
        %v1412 = vpop.f32.mrf.mxu0
        %1413 = vdwg.mxu0
        %1414 = vmatpush.bf16.msra.mxu0 %v1184
        %1415 = vmatpush.bf16.msra.mxu0 %v1182
        %1416 = vmatpush.bf16.msra.mxu0 %v1180
        %1417 = vmatpush.bf16.msra.mxu0 %v1178
        %1418 = vmatpush.bf16.msra.mxu0 %v1176
        %1419 = vmatpush.bf16.msra.mxu0 %v1174
        %1420 = vmatpush.bf16.msra.mxu0 %v1172
        %1421 = vmatpush.bf16.msra.mxu0 %v1170
        %1422 = vmatmul.bf16.gmra.mxu0 %v867
        %v1423 = vpop.f32.mrf.mxu0
        %v1424 = vadd.f32 %v1411, %v1423
        %v1425 = vpop.f32.mrf.mxu0
        %1426 = vdwg.mxu0
        %1427 = vmatpush.bf16.msra.mxu0 %v1200
        %1428 = vmatpush.bf16.msra.mxu0 %v1198
        %1429 = vmatpush.bf16.msra.mxu0 %v1196
        %1430 = vmatpush.bf16.msra.mxu0 %v1194
        %1431 = vmatpush.bf16.msra.mxu0 %v1192
        %1432 = vmatpush.bf16.msra.mxu0 %v1190
        %1433 = vmatpush.bf16.msra.mxu0 %v1188
        %1434 = vmatpush.bf16.msra.mxu0 %v1186
        %1435 = vmatmul.bf16.gmra.mxu0 %v868
        %v1436 = vpop.f32.mrf.mxu0
        %v1437 = vadd.f32 %v1424, %v1436
        %v1438 = vpop.f32.mrf.mxu0
        %1439 = vdwg.mxu0
        %1440 = vmatpush.bf16.msra.mxu0 0
        %1441 = vmatpush.bf16.msra.mxu0 0
        %1442 = vmatpush.bf16.msra.mxu0 0
        %1443 = vmatpush.bf16.msra.mxu0 0
        %1444 = vmatpush.bf16.msra.mxu0 0
        %1445 = vmatpush.bf16.msra.mxu0 0
        %1446 = vmatpush.bf16.msra.mxu0 0
        %1447 = vmatpush.bf16.msra.mxu0 %v1295
        %1448 = vmatmul.bf16.gmra.mxu0 %v1285
        %v1449 = vpop.f32.mrf.mxu0
        %v1450 = vadd.f32 %v1437, %v1449
        %v1451 = vpop.f32.mrf.mxu0
        %1452 = vdwg.mxu0
        %v1453 = vld [vmem:[%s662] sm:$0xff]
        %v1454 = vld [vmem:[%s662 + $0x8] sm:$0xff]
        %v1455 = vld [vmem:[%s662 + $0x10] sm:$0xff]
        %v1456 = vld [vmem:[%s662 + $0x18] sm:$0xff]
        %v1457 = vld [vmem:[%s662 + $0x20] sm:$0xff]
        %v1458 = vld [vmem:[%s662 + $0x28] sm:$0xff]
        %s1459 = scalar_lea.vmem %s3, 24
        %v1460 = vld [vmem:[%s1459] sm:$0x3f]
        %v1461 = vld [vmem:[%s3] sm:$0x3f]
        %vm1462 = vcmask 195584
        %v1464 = vsel %vm1462, %v1461, 0
        %1466 = vmatpush.msra.mxu0 0.0
        %1467 = vmatpush.msra.mxu0 0.0
        %1468 = vmatpush.msra.mxu0 0.0
        %1469 = vmatpush.msra.mxu0 0.0
        %1470 = vmatpush.msra.mxu0 0.0
        %1471 = vmatpush.msra.mxu0 0.0
        %1472 = vmatpush.msra.mxu0 0.0
        %1473 = vmatpush.msra.mxu0 0.0
        %1474 = vmatpush.msra.mxu0 0.0
        %1475 = vmatpush.msra.mxu0 0.0
        %1476 = vmatpush.msra.mxu0 0.0
        %1477 = vmatpush.msra.mxu0 0.0
        %1478 = vmatpush.msra.mxu0 0.0
        %1479 = vmatpush.msra.mxu0 %v1457
        %1480 = vmatpush.msra.mxu0 %v1455
        %1481 = vmatpush.msra.mxu0 %v1453
        %1482 = vmatmul.f32.gmra.mxu0 %v1464
        %v1483 = vpop.f32.mrf.mxu0
        %v1484 = vadd.f32 0.0, %v1483
        %1485 = vdwg.mxu0
        %1486 = vmatpush.msra.mxu0 0.0
        %1487 = vmatpush.msra.mxu0 0.0
        %1488 = vmatpush.msra.mxu0 0.0
        %1489 = vmatpush.msra.mxu0 0.0
        %1490 = vmatpush.msra.mxu0 0.0
        %1491 = vmatpush.msra.mxu0 0.0
        %1492 = vmatpush.msra.mxu0 0.0
        %1493 = vmatpush.msra.mxu0 0.0
        %1494 = vmatpush.msra.mxu0 0.0
        %1495 = vmatpush.msra.mxu0 0.0
        %1496 = vmatpush.msra.mxu0 0.0
        %1497 = vmatpush.msra.mxu0 0.0
        %1498 = vmatpush.msra.mxu0 0.0
        %1499 = vmatpush.msra.mxu0 %v1458
        %1500 = vmatpush.msra.mxu0 %v1456
        %1501 = vmatpush.msra.mxu0 %v1454
        %1502 = vmatmul.f32.gmra.mxu0 %v1464
        %v1503 = vpop.f32.mrf.mxu0
        %v1504 = vadd.f32 0.0, %v1503
        %1505 = vdwg.mxu0
        %v1506 = vld [vmem:[%s2] sm:$0x3f]
        %vm1507 = vcmask 48128
        %v1509 = vsel %vm1507, %v1506, 0
        %v1512 = vsel %vm1288, %v1372, 0
        %v1515 = vsel %vm1288, %v1450, 0
        %1517 = vmatpush.msra.mxu0 0.0
        %1518 = vmatpush.msra.mxu0 0.0
        %1519 = vmatpush.msra.mxu0 0.0
        %1520 = vmatpush.msra.mxu0 0.0
        %1521 = vmatpush.msra.mxu0 0.0
        %1522 = vmatpush.msra.mxu0 0.0
        %1523 = vmatpush.msra.mxu0 0.0
        %1524 = vmatpush.msra.mxu0 0.0
        %1525 = vmatpush.msra.mxu0 0.0
        %1526 = vmatpush.msra.mxu0 0.0
        %1527 = vmatpush.msra.mxu0 0.0
        %1528 = vmatpush.msra.mxu0 0.0
        %1529 = vmatpush.msra.mxu0 0.0
        %1530 = vmatpush.msra.mxu0 0.0
        %1531 = vmatpush.msra.mxu0 0.0
        %1532 = vmatpush.msra.mxu0 %v1512
        %1533 = vmatmul.f32.gmra.mxu0 %v1509
        %v1534 = vpop.f32.mrf.mxu0
        %v1535 = vadd.f32 0.0, %v1534
        %1536 = vdwg.mxu0
        %1537 = vmatpush.msra.mxu0 0.0
        %1538 = vmatpush.msra.mxu0 0.0
        %1539 = vmatpush.msra.mxu0 0.0
        %1540 = vmatpush.msra.mxu0 0.0
        %1541 = vmatpush.msra.mxu0 0.0
        %1542 = vmatpush.msra.mxu0 0.0
        %1543 = vmatpush.msra.mxu0 0.0
        %1544 = vmatpush.msra.mxu0 0.0
        %1545 = vmatpush.msra.mxu0 0.0
        %1546 = vmatpush.msra.mxu0 0.0
        %1547 = vmatpush.msra.mxu0 0.0
        %1548 = vmatpush.msra.mxu0 0.0
        %1549 = vmatpush.msra.mxu0 0.0
        %1550 = vmatpush.msra.mxu0 0.0
        %1551 = vmatpush.msra.mxu0 0.0
        %1552 = vmatpush.msra.mxu0 %v1515
        %1553 = vmatmul.f32.gmra.mxu0 %v1509
        %v1554 = vpop.f32.mrf.mxu0
        %v1555 = vadd.f32 0.0, %v1554
        %1556 = vdwg.mxu0
        %v1557 = vmul.f32 %v1484, %v1535
        %v1558 = vmul.f32 %v1504, %v1555
        %v1560 = vsel %vm1462, %v1460, 0
        %1562 = vmatpush.msra.mxu0 0.0
        %1563 = vmatpush.msra.mxu0 0.0
        %1564 = vmatpush.msra.mxu0 0.0
        %1565 = vmatpush.msra.mxu0 0.0
        %1566 = vmatpush.msra.mxu0 0.0
        %1567 = vmatpush.msra.mxu0 0.0
        %1568 = vmatpush.msra.mxu0 0.0
        %1569 = vmatpush.msra.mxu0 0.0
        %1570 = vmatpush.msra.mxu0 0.0
        %1571 = vmatpush.msra.mxu0 0.0
        %1572 = vmatpush.msra.mxu0 0.0
        %1573 = vmatpush.msra.mxu0 0.0
        %1574 = vmatpush.msra.mxu0 0.0
        %1575 = vmatpush.msra.mxu0 %v1457
        %1576 = vmatpush.msra.mxu0 %v1455
        %1577 = vmatpush.msra.mxu0 %v1453
        %1578 = vmatmul.f32.gmra.mxu0 %v1560
        %v1579 = vpop.f32.mrf.mxu0
        %v1580 = vadd.f32 %v1557, %v1579
        %1581 = vdwg.mxu0
        %1582 = vmatpush.msra.mxu0 0.0
        %1583 = vmatpush.msra.mxu0 0.0
        %1584 = vmatpush.msra.mxu0 0.0
        %1585 = vmatpush.msra.mxu0 0.0
        %1586 = vmatpush.msra.mxu0 0.0
        %1587 = vmatpush.msra.mxu0 0.0
        %1588 = vmatpush.msra.mxu0 0.0
        %1589 = vmatpush.msra.mxu0 0.0
        %1590 = vmatpush.msra.mxu0 0.0
        %1591 = vmatpush.msra.mxu0 0.0
        %1592 = vmatpush.msra.mxu0 0.0
        %1593 = vmatpush.msra.mxu0 0.0
        %1594 = vmatpush.msra.mxu0 0.0
        %1595 = vmatpush.msra.mxu0 %v1458
        %1596 = vmatpush.msra.mxu0 %v1456
        %1597 = vmatpush.msra.mxu0 %v1454
        %1598 = vmatmul.f32.gmra.mxu0 %v1560
        %v1599 = vpop.f32.mrf.mxu0
        %v1600 = vadd.f32 %v1558, %v1599
        %1601 = vdwg.mxu0
        %s1602 = scalar_lea.vmem %s3, 8
        %v1603 = vld [vmem:[%s1602] sm:$0x3f]
        %v1605 = vsel %vm1462, %v1603, 0
        %1607 = vmatpush.msra.mxu0 0.0
        %1608 = vmatpush.msra.mxu0 0.0
        %1609 = vmatpush.msra.mxu0 0.0
        %1610 = vmatpush.msra.mxu0 0.0
        %1611 = vmatpush.msra.mxu0 0.0
        %1612 = vmatpush.msra.mxu0 0.0
        %1613 = vmatpush.msra.mxu0 0.0
        %1614 = vmatpush.msra.mxu0 0.0
        %1615 = vmatpush.msra.mxu0 0.0
        %1616 = vmatpush.msra.mxu0 0.0
        %1617 = vmatpush.msra.mxu0 0.0
        %1618 = vmatpush.msra.mxu0 0.0
        %1619 = vmatpush.msra.mxu0 0.0
        %1620 = vmatpush.msra.mxu0 %v1457
        %1621 = vmatpush.msra.mxu0 %v1455
        %1622 = vmatpush.msra.mxu0 %v1453
        %1623 = vmatmul.f32.gmra.mxu0 %v1605
        %v1624 = vpop.f32.mrf.mxu0
        %v1625 = vadd.f32 0.0, %v1624
        %1626 = vdwg.mxu0
        %1627 = vmatpush.msra.mxu0 0.0
        %1628 = vmatpush.msra.mxu0 0.0
        %1629 = vmatpush.msra.mxu0 0.0
        %1630 = vmatpush.msra.mxu0 0.0
        %1631 = vmatpush.msra.mxu0 0.0
        %1632 = vmatpush.msra.mxu0 0.0
        %1633 = vmatpush.msra.mxu0 0.0
        %1634 = vmatpush.msra.mxu0 0.0
        %1635 = vmatpush.msra.mxu0 0.0
        %1636 = vmatpush.msra.mxu0 0.0
        %1637 = vmatpush.msra.mxu0 0.0
        %1638 = vmatpush.msra.mxu0 0.0
        %1639 = vmatpush.msra.mxu0 0.0
        %1640 = vmatpush.msra.mxu0 %v1458
        %1641 = vmatpush.msra.mxu0 %v1456
        %1642 = vmatpush.msra.mxu0 %v1454
        %1643 = vmatmul.f32.gmra.mxu0 %v1605
        %v1644 = vpop.f32.mrf.mxu0
        %v1645 = vadd.f32 0.0, %v1644
        %1646 = vdwg.mxu0
        %s1647 = scalar_lea.vmem %s2, 8
        %v1648 = vld [vmem:[%s1647] sm:$0x3f]
        %v1650 = vsel %vm1507, %v1648, 0
        %1652 = vmatpush.msra.mxu0 0.0
        %1653 = vmatpush.msra.mxu0 0.0
        %1654 = vmatpush.msra.mxu0 0.0
        %1655 = vmatpush.msra.mxu0 0.0
        %1656 = vmatpush.msra.mxu0 0.0
        %1657 = vmatpush.msra.mxu0 0.0
        %1658 = vmatpush.msra.mxu0 0.0
        %1659 = vmatpush.msra.mxu0 0.0
        %1660 = vmatpush.msra.mxu0 0.0
        %1661 = vmatpush.msra.mxu0 0.0
        %1662 = vmatpush.msra.mxu0 0.0
        %1663 = vmatpush.msra.mxu0 0.0
        %1664 = vmatpush.msra.mxu0 0.0
        %1665 = vmatpush.msra.mxu0 0.0
        %1666 = vmatpush.msra.mxu0 0.0
        %1667 = vmatpush.msra.mxu0 %v1512
        %1668 = vmatmul.f32.gmra.mxu0 %v1650
        %v1669 = vpop.f32.mrf.mxu0
        %v1670 = vadd.f32 0.0, %v1669
        %1671 = vdwg.mxu0
        %1672 = vmatpush.msra.mxu0 0.0
        %1673 = vmatpush.msra.mxu0 0.0
        %1674 = vmatpush.msra.mxu0 0.0
        %1675 = vmatpush.msra.mxu0 0.0
        %1676 = vmatpush.msra.mxu0 0.0
        %1677 = vmatpush.msra.mxu0 0.0
        %1678 = vmatpush.msra.mxu0 0.0
        %1679 = vmatpush.msra.mxu0 0.0
        %1680 = vmatpush.msra.mxu0 0.0
        %1681 = vmatpush.msra.mxu0 0.0
        %1682 = vmatpush.msra.mxu0 0.0
        %1683 = vmatpush.msra.mxu0 0.0
        %1684 = vmatpush.msra.mxu0 0.0
        %1685 = vmatpush.msra.mxu0 0.0
        %1686 = vmatpush.msra.mxu0 0.0
        %1687 = vmatpush.msra.mxu0 %v1515
        %1688 = vmatmul.f32.gmra.mxu0 %v1650
        %v1689 = vpop.f32.mrf.mxu0
        %v1690 = vadd.f32 0.0, %v1689
        %1691 = vdwg.mxu0
        %v1692 = vmul.f32 %v1625, %v1670
        %v1693 = vmul.f32 %v1645, %v1690
        %v1694 = vadd.f32 %v1580, %v1692
        %v1695 = vadd.f32 %v1600, %v1693
        %s1696 = scalar_lea.vmem %s3, 16
        %v1697 = vld [vmem:[%s1696] sm:$0x3f]
        %v1699 = vsel %vm1462, %v1697, 0
        %1701 = vmatpush.msra.mxu0 0.0
        %1702 = vmatpush.msra.mxu0 0.0
        %1703 = vmatpush.msra.mxu0 0.0
        %1704 = vmatpush.msra.mxu0 0.0
        %1705 = vmatpush.msra.mxu0 0.0
        %1706 = vmatpush.msra.mxu0 0.0
        %1707 = vmatpush.msra.mxu0 0.0
        %1708 = vmatpush.msra.mxu0 0.0
        %1709 = vmatpush.msra.mxu0 0.0
        %1710 = vmatpush.msra.mxu0 0.0
        %1711 = vmatpush.msra.mxu0 0.0
        %1712 = vmatpush.msra.mxu0 0.0
        %1713 = vmatpush.msra.mxu0 0.0
        %1714 = vmatpush.msra.mxu0 %v1457
        %1715 = vmatpush.msra.mxu0 %v1455
        %1716 = vmatpush.msra.mxu0 %v1453
        %1717 = vmatmul.f32.gmra.mxu0 %v1699
        %v1718 = vpop.f32.mrf.mxu0
        %v1719 = vadd.f32 0.0, %v1718
        %1720 = vdwg.mxu0
        %1721 = vmatpush.msra.mxu0 0.0
        %1722 = vmatpush.msra.mxu0 0.0
        %1723 = vmatpush.msra.mxu0 0.0
        %1724 = vmatpush.msra.mxu0 0.0
        %1725 = vmatpush.msra.mxu0 0.0
        %1726 = vmatpush.msra.mxu0 0.0
        %1727 = vmatpush.msra.mxu0 0.0
        %1728 = vmatpush.msra.mxu0 0.0
        %1729 = vmatpush.msra.mxu0 0.0
        %1730 = vmatpush.msra.mxu0 0.0
        %1731 = vmatpush.msra.mxu0 0.0
        %1732 = vmatpush.msra.mxu0 0.0
        %1733 = vmatpush.msra.mxu0 0.0
        %1734 = vmatpush.msra.mxu0 %v1458
        %1735 = vmatpush.msra.mxu0 %v1456
        %1736 = vmatpush.msra.mxu0 %v1454
        %1737 = vmatmul.f32.gmra.mxu0 %v1699
        %v1738 = vpop.f32.mrf.mxu0
        %v1739 = vadd.f32 0.0, %v1738
        %1740 = vdwg.mxu0
        %s1741 = scalar_lea.vmem %s2, 16
        %v1742 = vld [vmem:[%s1741] sm:$0x3f]
        %v1744 = vsel %vm1507, %v1742, 0
        %1746 = vmatpush.msra.mxu0 0.0
        %1747 = vmatpush.msra.mxu0 0.0
        %1748 = vmatpush.msra.mxu0 0.0
        %1749 = vmatpush.msra.mxu0 0.0
        %1750 = vmatpush.msra.mxu0 0.0
        %1751 = vmatpush.msra.mxu0 0.0
        %1752 = vmatpush.msra.mxu0 0.0
        %1753 = vmatpush.msra.mxu0 0.0
        %1754 = vmatpush.msra.mxu0 0.0
        %1755 = vmatpush.msra.mxu0 0.0
        %1756 = vmatpush.msra.mxu0 0.0
        %1757 = vmatpush.msra.mxu0 0.0
        %1758 = vmatpush.msra.mxu0 0.0
        %1759 = vmatpush.msra.mxu0 0.0
        %1760 = vmatpush.msra.mxu0 0.0
        %1761 = vmatpush.msra.mxu0 %v1512
        %1762 = vmatmul.f32.gmra.mxu0 %v1744
        %v1763 = vpop.f32.mrf.mxu0
        %v1764 = vadd.f32 0.0, %v1763
        %1765 = vdwg.mxu0
        %1766 = vmatpush.msra.mxu0 0.0
        %1767 = vmatpush.msra.mxu0 0.0
        %1768 = vmatpush.msra.mxu0 0.0
        %1769 = vmatpush.msra.mxu0 0.0
        %1770 = vmatpush.msra.mxu0 0.0
        %1771 = vmatpush.msra.mxu0 0.0
        %1772 = vmatpush.msra.mxu0 0.0
        %1773 = vmatpush.msra.mxu0 0.0
        %1774 = vmatpush.msra.mxu0 0.0
        %1775 = vmatpush.msra.mxu0 0.0
        %1776 = vmatpush.msra.mxu0 0.0
        %1777 = vmatpush.msra.mxu0 0.0
        %1778 = vmatpush.msra.mxu0 0.0
        %1779 = vmatpush.msra.mxu0 0.0
        %1780 = vmatpush.msra.mxu0 0.0
        %1781 = vmatpush.msra.mxu0 %v1515
        %1782 = vmatmul.f32.gmra.mxu0 %v1744
        %v1783 = vpop.f32.mrf.mxu0
        %v1784 = vadd.f32 0.0, %v1783
        %1785 = vdwg.mxu0
        %v1786 = vmul.f32 %v1719, %v1764
        %v1787 = vmul.f32 %v1739, %v1784
        %v1788 = vadd.f32 %v1694, %v1786
        %v1789 = vadd.f32 %v1695, %v1787
        %1790 = vst [vmem:[%s712] sm:$0x3f] %v1788
        %1791 = vst [vmem:[%s712 + $0x8] sm:$0x3f] %v1789
        %s1792 = smul.u32 2, %s18
        %p1793 = scmp.lt.s32.totalorder %s1792, 7
        %s1794 = scalar_select %p1793, %s1792, 7
        %s1795 = smul.addr %s1794, 8
        %s1796 = scalar_lea.vmem %s7, %s1795
        // Predicated region
        $region110: #{_lambda_.1} parent=100 // pred_check
          %p1797 = pneg %p198
        $region111: #{_lambda_.1} parent=100 // pred_check_branch
          %1799 = sbr.rel (%p1797) target = $region113
        $region112: #{_lambda_.1} parent=100 // pred_region
          %s1800 = smul.u32 2, %s18
        $region113: #{_lambda_.1} parent=100 // pred_fallthru
          _
      $region101: #{_lambda_.1} parent=5 // pred_fallthru
        _
      %p1801 = scmp.le.s32.totalorder 2, %s13
      // Predicated region
      $region114: #{_lambda_.1} parent=5 // pred_check
        %p1802 = pneg %p1801
      $region115: #{_lambda_.1} parent=5 // pred_check_branch
        %1804 = sbr.rel (%p1802) target = $region117
      $region116: #{_lambda_.1} parent=5 // pred_region
        %s1805 = ssub.s32 %s13, 2
        // Predicated region
        $region118: #{_lambda_.1} parent=116 // pred_check
          %p1806 = pneg %p204
        $region119: #{_lambda_.1} parent=116 // pred_check_branch
          %1808 = sbr.rel (%p1806) target = $region121
        $region120: #{_lambda_.1} parent=116 // pred_region
          %s1809 = smul.u32 2, %s19
          %p1810 = scmp.lt.s32.totalorder %s1809, 7
          %s1811 = scalar_select %p1810, %s1809, 7
          %s1812 = smul.addr %s1811, 8
          %s1813 = scalar_lea.vmem %s7, %s1812
        $region121: #{_lambda_.1} parent=116 // pred_fallthru
          _
      $region117: #{_lambda_.1} parent=5 // pred_fallthru
        _
    $region6: #{_lambda_.1} parent=1 // loop_footer
      %s17 = sadd.s32 1, %s13
    $region7: #{_lambda_.1} parent=1 // loop_footer_branch
      %12 = sbr.rel target = $region3
    $region8: #{_lambda_.1} parent=1 // loop_exit
      _

</llo_original>
